<compile_context>
chip_gen: v5e
topology: v5e:2x2
jax: 0.10.0
libtpu: 0.0.40
codegen_flags: <defaults>
</compile_context>

<pallas_src>
import numpy as np

import jax
import jax.numpy as jnp
from jax.experimental import pallas as pl
from jax.experimental.pallas import tpu as pltpu


# --------------------------- fused Pallas kernel -----------------------------

def _vae_fused_kernel(x_ref, eps_ref,
                      w1_ref, w2_ref, wh_ref, wd2_ref, wd3_ref, wd45_ref,
                      bias_ref,
                      recon_ref, musig_ref):
    f32 = jnp.float32
    bf16 = jnp.bfloat16

    def mm(a, w, b):
        # bf16 MXU inputs, f32 accumulation, f32 bias add.
        return jnp.dot(a.astype(bf16), w, preferred_element_type=f32) + b

    # packed biases (f32), all slices 128-lane aligned
    b1 = bias_ref[0:1, 0:1024]
    b2 = bias_ref[1:2, 0:512]
    bh = bias_ref[2:3, 0:256]
    bd2 = bias_ref[3:4, 0:128]
    bd3 = bias_ref[4:5, 0:256]
    bd4 = bias_ref[5:6, 0:256]
    bd5 = bias_ref[6:7, 0:256]

    x = x_ref[...]                                   # (B, 256) f32, cols 196.. == 0

    # conv1 (1->6, k=3) + ReLU + 2x2 max-pool as one lane-dense matmul; the 4
    # pooling taps are packed as 128-aligned 256-wide column blocks.
    y1 = mm(x, w1_ref[...], b1)                      # (B, 1024)
    p1 = jnp.maximum(jnp.maximum(y1[:, 0:256], y1[:, 256:512]),
                     jnp.maximum(y1[:, 512:768], y1[:, 768:1024]))
    p1 = jnp.maximum(p1, 0.0)                        # (B, 256); cols 216.. == 0

    # conv2 (6->18, k=3) + ReLU + 2x2 max-pool + NCHW flatten (folded into W2).
    y2 = mm(p1, w2_ref[...], b2)                     # (B, 512)
    p2 = jnp.maximum(jnp.maximum(y2[:, 0:128], y2[:, 128:256]),
                     jnp.maximum(y2[:, 256:384], y2[:, 384:512]))
    p2 = jnp.maximum(p2, 0.0)                        # (B, 128); cols 72.. == 0

    # fused fc1_mu | fc1_sig head: one N=256 matmul, mu in cols 0:128,
    # sigma in cols 128:256 (actual widths 50 each, padding lanes are zero).
    head = jnp.maximum(mm(p2, wh_ref[...], bh), 0.0)  # (B, 256)
    mu = head[:, 0:128]
    sg = head[:, 128:256]

    # reparameterize: z = mu + eps @ sigma (eps is (B, B), mirrors torch.mm).
    # Tiny matmul -> keep it exact in f32.
    z = mu + jnp.dot(eps_ref[...], sg, preferred_element_type=f32)

    # decoder
    h = jnp.maximum(mm(z, wd2_ref[...], bd2), 0.0)    # (B, 128)
    h = jnp.maximum(mm(h, wd3_ref[...], bd3), 0.0)    # (B, 256)
    h = jnp.maximum(mm(h, wd45_ref[0], bd4), 0.0)     # (B, 256)
    logits = mm(h, wd45_ref[1], bd5)                  # (B, 256)

    # sigmoid via EUP-friendly tanh: sigmoid(x) = 0.5*(tanh(0.5x)+1)
    recon_ref[...] = 0.5 * (jnp.tanh(0.5 * logits) + 1.0)
    musig_ref[...] = head


def vae_forward(x_nchw, prepped, eps):
    B = x_nchw.shape[0]
    x_flat = x_nchw.reshape(B, 14 * 14).astype(jnp.float32)
    x_pad = jnp.zeros((B, 256), jnp.float32).at[:, :196].set(x_flat)

    args = (x_pad, eps.astype(jnp.float32),
            prepped["w1"], prepped["w2"], prepped["wh"],
            prepped["wd2"], prepped["wd3"], prepped["wd45"], prepped["bias"])

    vmem = pl.BlockSpec(memory_space=pltpu.MemorySpace.VMEM)
    flops = 2 * B * (256 * 1024 + 256 * 512 + 128 * 256 + B * 128
                     + 128 * 128 + 128 * 256 + 256 * 256 + 256 * 256)
    bytes_accessed = sum(int(np.prod(a.shape)) * a.dtype.itemsize for a in args) \
        + 4 * B * (256 + 256)

    recon_p, musig = pl.pallas_call(
        _vae_fused_kernel,
        out_shape=(jax.ShapeDtypeStruct((B, 256), jnp.float32),
                   jax.ShapeDtypeStruct((B, 256), jnp.float32)),
        in_specs=[vmem] * len(args),
        out_specs=(vmem, vmem),
        cost_estimate=pl.CostEstimate(flops=flops,
                                      transcendentals=B * 256,
                                      bytes_accessed=bytes_accessed),
    )(*args)

    # lane-dense kernel outputs; slice to logical widths here (fuses into XLA)
    return recon_p[:, :196], musig[:, :50], musig[:, 128:178]


# ----------------- one-time host-side weight repacking -----------------------

def _conv_as_dense(w_hwio, H, W):
    """Dense matmul matrix for a VALID kxk conv.

    Input flat order : ((i*W + j)*cin + ci)
    Output flat order: ((oi*Wo + oj)*cout + co)
    """
    w_hwio = np.asarray(w_hwio, np.float32)
    kh, kw, cin, cout = w_hwio.shape
    Ho, Wo = H - kh + 1, W - kw + 1
    M = np.zeros((H * W * cin, Ho * Wo * cout), np.float32)
    for oi in range(Ho):
        for oj in range(Wo):
            c0 = (oi * Wo + oj) * cout
            for a in range(kh):
                for kb in range(kw):
                    for ci in range(cin):
                        row = ((oi + a) * W + (oj + kb)) * cin + ci
                        M[row, c0:c0 + cout] = w_hwio[a, kb, ci, :]
    return M, Ho, Wo


def prepare_params(p):
    """Fold conv->dense, max-pool gathers, NCHW flatten, 128-lane padding and
    bf16 weight cast into packed operand arrays.  Runs once on the host."""
    f = lambda a: np.asarray(a, np.float32)

    # conv1 (14x14x1 -> 12x12x6), pool1 taps packed in 256-wide blocks (NHWC).
    w1d, Ho1, Wo1 = _conv_as_dense(f(p["conv1_w"]), 14, 14)       # (196, 864)
    b1d = np.tile(f(p["conv1_b"]), Ho1 * Wo1)                     # (864,)
    C1, Hp1, Wp1 = 6, Ho1 // 2, Wo1 // 2                          # 6, 6, 6
    n1 = Hp1 * Wp1 * C1                                           # 216
    W1 = np.zeros((256, 4 * 256), np.float32)                     # K padded 196->256
    B1 = np.zeros((1, 4 * 256), np.float32)
    for k, (di, dj) in enumerate(((0, 0), (0, 1), (1, 0), (1, 1))):
        src = np.array([((2 * pi + di) * Wo1 + (2 * pj + dj)) * C1 + c
                        for pi in range(Hp1) for pj in range(Wp1)
                        for c in range(C1)], np.int32)
        W1[:196, k * 256:k * 256 + n1] = w1d[:, src]
        B1[0, k * 256:k * 256 + n1] = b1d[src]

    # conv2 (6x6x6 -> 4x4x18), pool2 taps in 128-wide blocks, output columns
    # already in PyTorch NCHW flatten order (c, h, w) -> fc1 consumes directly.
    w2d, Ho2, Wo2 = _conv_as_dense(f(p["conv2_w"]), 6, 6)         # (216, 288)
    b2d = np.tile(f(p["conv2_b"]), Ho2 * Wo2)                     # (288,)
    C2, Hp2, Wp2 = 18, Ho2 // 2, Wo2 // 2                         # 18, 2, 2
    n2 = Hp2 * Wp2 * C2                                           # 72
    W2 = np.zeros((256, 4 * 128), np.float32)
    B2 = np.zeros((1, 4 * 128), np.float32)
    for k, (di, dj) in enumerate(((0, 0), (0, 1), (1, 0), (1, 1))):
        src = np.array([((2 * pi + di) * Wo2 + (2 * pj + dj)) * C2 + c
                        for c in range(C2) for pi in range(Hp2)
                        for pj in range(Wp2)], np.int32)
        W2[:w2d.shape[0], k * 128:k * 128 + n2] = w2d[:, src]
        B2[0, k * 128:k * 128 + n2] = b2d[src]

    def pad_w(w, rows, cols):
        out = np.zeros((rows, cols), np.float32)
        w = f(w)
        out[:w.shape[0], :w.shape[1]] = w
        return out

    # fused fc1_mu | fc1_sig head: (72,50)+(72,50) -> (128, 256)
    Whead = np.zeros((128, 256), np.float32)
    Whead[:72, 0:50] = f(p["w_mu"])
    Whead[:72, 128:178] = f(p["w_sig"])

    Wd2 = pad_w(p["w2"], 128, 128)
    Wd3 = pad_w(p["w3"], 128, 256)
    Wd45 = np.stack([pad_w(p["w4"], 256, 256), pad_w(p["w5"], 256, 256)])

    # all biases packed into one f32 slab (rows: b1,b2,bhead,bd2,bd3,bd4,bd5)
    bias = np.zeros((8, 1024), np.float32)
    bias[0, :1024] = B1[0]
    bias[1, :512] = B2[0]
    bias[2, 0:50] = f(p["b_mu"])
    bias[2, 128:178] = f(p["b_sig"])
    bias[3, 0:100] = f(p["b2"])
    bias[4, 0:150] = f(p["b3"])
    bias[5, 0:196] = f(p["b4"])
    bias[6, 0:196] = f(p["b5"])

    bf = lambda a: jnp.asarray(a, jnp.bfloat16)
    return dict(
        w1=bf(W1), w2=bf(W2), wh=bf(Whead),
        wd2=bf(Wd2), wd3=bf(Wd3), wd45=bf(Wd45),
        bias=jnp.asarray(bias, jnp.float32),
    )


# --------------------------- parameters --------------------------------------

def init_params(key):
    ks = jax.random.split(key, 16)

    def w(k, shape, fan_in):
        return jax.random.normal(k, shape, jnp.float32) / jnp.sqrt(float(fan_in))

    return {
        # conv weights stored HWIO (kh, kw, cin, cout)
        "conv1_w": w(ks[0], (3, 3, 1, 6), 9),
        "conv1_b": w(ks[1], (6,), 9),
        "conv2_w": w(ks[2], (3, 3, 6, 18), 54),
        "conv2_b": w(ks[3], (18,), 54),
        # linear weights stored (in, out)
        "w_mu": w(ks[4], (72, 50), 72), "b_mu": w(ks[5], (50,), 72),
        "w_sig": w(ks[6], (72, 50), 72), "b_sig": w(ks[7], (50,), 72),
        "w2": w(ks[8], (50, 100), 50), "b2": w(ks[9], (100,), 50),
        "w3": w(ks[10], (100, 150), 100), "b3": w(ks[11], (150,), 100),
        "w4": w(ks[12], (150, 196), 150), "b4": w(ks[13], (196,), 150),
        "w5": w(ks[14], (196, 196), 196), "b5": w(ks[15], (196,), 196),
    }


# --------------------------- pure-JAX reference -------------------------------

def _maxpool2x2_nchw(x):
    B, C, H, W = x.shape
    return x.reshape(B, C, H // 2, 2, W // 2, 2).max(axis=(3, 5))


def vae_reference(x, params, eps):
    dn = ("NCHW", "OIHW", "NCHW")
    w1 = jnp.transpose(params["conv1_w"], (3, 2, 0, 1))
    c1 = jax.lax.conv_general_dilated(x, w1, (1, 1), "VALID",
                                      dimension_numbers=dn)
    c1 = jnp.maximum(c1 + params["conv1_b"][None, :, None, None], 0.0)
    p1 = _maxpool2x2_nchw(c1)
    w2 = jnp.transpose(params["conv2_w"], (3, 2, 0, 1))
    c2 = jax.lax.conv_general_dilated(p1, w2, (1, 1), "VALID",
                                      dimension_numbers=dn)
    c2 = jnp.maximum(c2 + params["conv2_b"][None, :, None, None], 0.0)
    p2 = _maxpool2x2_nchw(c2)
    flat = p2.reshape(p2.shape[0], 72)                 # NCHW flatten
    mu = jnp.maximum(flat @ params["w_mu"] + params["b_mu"], 0.0)
    sg = jnp.maximum(flat @ params["w_sig"] + params["b_sig"], 0.0)
    z = mu + eps @ sg
    h = jnp.maximum(z @ params["w2"] + params["b2"], 0.0)
    h = jnp.maximum(h @ params["w3"] + params["b3"], 0.0)
    h = jnp.maximum(h @ params["w4"] + params["b4"], 0.0)
    logits = h @ params["w5"] + params["b5"]
    return jax.nn.sigmoid(logits), mu, sg


# --------------------------- main ---------------------------------------------

if __name__ == "__main__":
    key = jax.random.PRNGKey(0)
    pkey, xkey, ekey = jax.random.split(key, 3)

    B = 8
    params = init_params(pkey)
    prepped = prepare_params(params)   # one-time host-side weight repack

    x = jax.random.normal(xkey, (B, 1, 14, 14), jnp.float32)
    # torch.randn((sigma.size(0), sigma.size(0))) -> deterministic (B, B) noise
    eps = jax.random.normal(ekey, (B, B), jnp.float32)

    fwd = jax.jit(vae_forward)
    recon, mu, sigma = fwd(x, prepped, eps)
    jax.block_until_ready((recon, mu, sigma))

    assert recon.shape == (B, 196)
    assert mu.shape == (B, 50)
    assert sigma.shape == (B, 50)

    # correctness check against an independent pure-JAX reference
    recon_r, mu_r, sg_r = jax.jit(vae_reference)(x, params, eps)
    np.testing.assert_allclose(np.asarray(mu), np.asarray(mu_r),
                               atol=5e-2, rtol=5e-2)
    np.testing.assert_allclose(np.asarray(sigma), np.asarray(sg_r),
                               atol=5e-2, rtol=5e-2)
    np.testing.assert_allclose(np.asarray(recon), np.asarray(recon_r),
                               atol=5e-2, rtol=5e-2)

    print("KERNEL_OK")
</pallas_src>

<mosaic_0001>
module attributes {stable_mosaic.version = 11 : i64} {
  func.func @_vae_fused_kernel(%arg0: memref<8x256xf32, #tpu.memory_space<vmem>>, %arg1: memref<8x8xf32, #tpu.memory_space<vmem>>, %arg2: memref<256x1024xbf16, #tpu.memory_space<vmem>>, %arg3: memref<256x512xbf16, #tpu.memory_space<vmem>>, %arg4: memref<128x256xbf16, #tpu.memory_space<vmem>>, %arg5: memref<128x128xbf16, #tpu.memory_space<vmem>>, %arg6: memref<128x256xbf16, #tpu.memory_space<vmem>>, %arg7: memref<2x256x256xbf16, #tpu.memory_space<vmem>>, %arg8: memref<8x1024xf32, #tpu.memory_space<vmem>>, %arg9: memref<8x256xf32, #tpu.memory_space<vmem>>, %arg10: memref<8x256xf32, #tpu.memory_space<vmem>>) attributes {dimension_semantics = [], scalar_prefetch = 0 : i64, scratch_operands = 0 : i64, tpu.core_type = #tpu.core_type<tc>} {
    %c0 = arith.constant 0 : index
    %c0_0 = arith.constant 0 : index
    %0 = vector.load %arg8[%c0, %c0_0] : memref<8x1024xf32, #tpu.memory_space<vmem>>, vector<1x1024xf32>
    %c1 = arith.constant 1 : index
    %c0_1 = arith.constant 0 : index
    %1 = vector.load %arg8[%c1, %c0_1] : memref<8x1024xf32, #tpu.memory_space<vmem>>, vector<1x512xf32>
    %c2 = arith.constant 2 : index
    %c0_2 = arith.constant 0 : index
    %2 = vector.load %arg8[%c2, %c0_2] : memref<8x1024xf32, #tpu.memory_space<vmem>>, vector<1x256xf32>
    %c3 = arith.constant 3 : index
    %c0_3 = arith.constant 0 : index
    %3 = vector.load %arg8[%c3, %c0_3] : memref<8x1024xf32, #tpu.memory_space<vmem>>, vector<1x128xf32>
    %c4 = arith.constant 4 : index
    %c0_4 = arith.constant 0 : index
    %4 = vector.load %arg8[%c4, %c0_4] : memref<8x1024xf32, #tpu.memory_space<vmem>>, vector<1x256xf32>
    %c5 = arith.constant 5 : index
    %c0_5 = arith.constant 0 : index
    %5 = vector.load %arg8[%c5, %c0_5] : memref<8x1024xf32, #tpu.memory_space<vmem>>, vector<1x256xf32>
    %c6 = arith.constant 6 : index
    %c0_6 = arith.constant 0 : index
    %6 = vector.load %arg8[%c6, %c0_6] : memref<8x1024xf32, #tpu.memory_space<vmem>>, vector<1x256xf32>
    %c0_7 = arith.constant 0 : index
    %c0_8 = arith.constant 0 : index
    %7 = vector.load %arg0[%c0_7, %c0_8] : memref<8x256xf32, #tpu.memory_space<vmem>>, vector<8x256xf32>
    %c0_9 = arith.constant 0 : index
    %c0_10 = arith.constant 0 : index
    %8 = vector.load %arg2[%c0_9, %c0_10] : memref<256x1024xbf16, #tpu.memory_space<vmem>>, vector<256x1024xbf16>
    %9 = arith.truncf %7 : vector<8x256xf32> to vector<8x256xbf16>
    %cst = arith.constant dense<0.000000e+00> : vector<8x1024xf32>
    %10 = tpu.matmul %9, %8, %cst {dimension_numbers = #tpu.dot_dimension_numbers<[1], [0], [0], [1], [0, 0, 1, 1], [], []>} : vector<8x256xbf16>, vector<256x1024xbf16>, vector<8x1024xf32> -> vector<8x1024xf32>
    %11 = vector.broadcast %0 : vector<1x1024xf32> to vector<8x1024xf32>
    %12 = arith.addf %10, %11 : vector<8x1024xf32>
    %13 = vector.extract_strided_slice %12 {offsets = [0, 0], sizes = [8, 256], strides = [1, 1]} : vector<8x1024xf32> to vector<8x256xf32>
    %14 = vector.extract_strided_slice %12 {offsets = [0, 256], sizes = [8, 256], strides = [1, 1]} : vector<8x1024xf32> to vector<8x256xf32>
    %15 = arith.maximumf %13, %14 : vector<8x256xf32>
    %16 = vector.extract_strided_slice %12 {offsets = [0, 512], sizes = [8, 256], strides = [1, 1]} : vector<8x1024xf32> to vector<8x256xf32>
    %17 = vector.extract_strided_slice %12 {offsets = [0, 768], sizes = [8, 256], strides = [1, 1]} : vector<8x1024xf32> to vector<8x256xf32>
    %18 = arith.maximumf %16, %17 : vector<8x256xf32>
    %19 = arith.maximumf %15, %18 : vector<8x256xf32>
    %cst_11 = arith.constant 0.000000e+00 : f32
    %20 = vector.broadcast %cst_11 : f32 to vector<8x256xf32>
    %21 = arith.maximumf %19, %20 : vector<8x256xf32>
    %c0_12 = arith.constant 0 : index
    %c0_13 = arith.constant 0 : index
    %22 = vector.load %arg3[%c0_12, %c0_13] : memref<256x512xbf16, #tpu.memory_space<vmem>>, vector<256x512xbf16>
    %23 = arith.truncf %21 : vector<8x256xf32> to vector<8x256xbf16>
    %cst_14 = arith.constant dense<0.000000e+00> : vector<8x512xf32>
    %24 = tpu.matmul %23, %22, %cst_14 {dimension_numbers = #tpu.dot_dimension_numbers<[1], [0], [0], [1], [0, 0, 1, 1], [], []>} : vector<8x256xbf16>, vector<256x512xbf16>, vector<8x512xf32> -> vector<8x512xf32>
    %25 = vector.broadcast %1 : vector<1x512xf32> to vector<8x512xf32>
    %26 = arith.addf %24, %25 : vector<8x512xf32>
    %27 = vector.extract_strided_slice %26 {offsets = [0, 0], sizes = [8, 128], strides = [1, 1]} : vector<8x512xf32> to vector<8x128xf32>
    %28 = vector.extract_strided_slice %26 {offsets = [0, 128], sizes = [8, 128], strides = [1, 1]} : vector<8x512xf32> to vector<8x128xf32>
    %29 = arith.maximumf %27, %28 : vector<8x128xf32>
    %30 = vector.extract_strided_slice %26 {offsets = [0, 256], sizes = [8, 128], strides = [1, 1]} : vector<8x512xf32> to vector<8x128xf32>
    %31 = vector.extract_strided_slice %26 {offsets = [0, 384], sizes = [8, 128], strides = [1, 1]} : vector<8x512xf32> to vector<8x128xf32>
    %32 = arith.maximumf %30, %31 : vector<8x128xf32>
    %33 = arith.maximumf %29, %32 : vector<8x128xf32>
    %cst_15 = arith.constant 0.000000e+00 : f32
    %34 = vector.broadcast %cst_15 : f32 to vector<8x128xf32>
    %35 = arith.maximumf %33, %34 : vector<8x128xf32>
    %c0_16 = arith.constant 0 : index
    %c0_17 = arith.constant 0 : index
    %36 = vector.load %arg4[%c0_16, %c0_17] : memref<128x256xbf16, #tpu.memory_space<vmem>>, vector<128x256xbf16>
    %37 = arith.truncf %35 : vector<8x128xf32> to vector<8x128xbf16>
    %cst_18 = arith.constant dense<0.000000e+00> : vector<8x256xf32>
    %38 = tpu.matmul %37, %36, %cst_18 {dimension_numbers = #tpu.dot_dimension_numbers<[1], [0], [0], [1], [0, 0, 1, 1], [], []>} : vector<8x128xbf16>, vector<128x256xbf16>, vector<8x256xf32> -> vector<8x256xf32>
    %39 = vector.broadcast %2 : vector<1x256xf32> to vector<8x256xf32>
    %40 = arith.addf %38, %39 : vector<8x256xf32>
    %cst_19 = arith.constant 0.000000e+00 : f32
    %41 = vector.broadcast %cst_19 : f32 to vector<8x256xf32>
    %42 = arith.maximumf %40, %41 : vector<8x256xf32>
    %43 = vector.extract_strided_slice %42 {offsets = [0, 0], sizes = [8, 128], strides = [1, 1]} : vector<8x256xf32> to vector<8x128xf32>
    %44 = vector.extract_strided_slice %42 {offsets = [0, 128], sizes = [8, 128], strides = [1, 1]} : vector<8x256xf32> to vector<8x128xf32>
    %c0_20 = arith.constant 0 : index
    %c0_21 = arith.constant 0 : index
    %45 = vector.load %arg1[%c0_20, %c0_21] : memref<8x8xf32, #tpu.memory_space<vmem>>, vector<8x8xf32>
    %cst_22 = arith.constant dense<0.000000e+00> : vector<8x128xf32>
    %46 = tpu.matmul %45, %44, %cst_22 {dimension_numbers = #tpu.dot_dimension_numbers<[1], [0], [0], [1], [0, 0, 1, 1], [], []>} : vector<8x8xf32>, vector<8x128xf32>, vector<8x128xf32> -> vector<8x128xf32>
    %47 = arith.addf %43, %46 : vector<8x128xf32>
    %c0_23 = arith.constant 0 : index
    %c0_24 = arith.constant 0 : index
    %48 = vector.load %arg5[%c0_23, %c0_24] : memref<128x128xbf16, #tpu.memory_space<vmem>>, vector<128x128xbf16>
    %49 = arith.truncf %47 : vector<8x128xf32> to vector<8x128xbf16>
    %cst_25 = arith.constant dense<0.000000e+00> : vector<8x128xf32>
    %50 = tpu.matmul %49, %48, %cst_25 {dimension_numbers = #tpu.dot_dimension_numbers<[1], [0], [0], [1], [0, 0, 1, 1], [], []>} : vector<8x128xbf16>, vector<128x128xbf16>, vector<8x128xf32> -> vector<8x128xf32>
    %51 = vector.broadcast %3 : vector<1x128xf32> to vector<8x128xf32>
    %52 = arith.addf %50, %51 : vector<8x128xf32>
    %cst_26 = arith.constant 0.000000e+00 : f32
    %53 = vector.broadcast %cst_26 : f32 to vector<8x128xf32>
    %54 = arith.maximumf %52, %53 : vector<8x128xf32>
    %c0_27 = arith.constant 0 : index
    %c0_28 = arith.constant 0 : index
    %55 = vector.load %arg6[%c0_27, %c0_28] : memref<128x256xbf16, #tpu.memory_space<vmem>>, vector<128x256xbf16>
    %56 = arith.truncf %54 : vector<8x128xf32> to vector<8x128xbf16>
    %cst_29 = arith.constant dense<0.000000e+00> : vector<8x256xf32>
    %57 = tpu.matmul %56, %55, %cst_29 {dimension_numbers = #tpu.dot_dimension_numbers<[1], [0], [0], [1], [0, 0, 1, 1], [], []>} : vector<8x128xbf16>, vector<128x256xbf16>, vector<8x256xf32> -> vector<8x256xf32>
    %58 = vector.broadcast %4 : vector<1x256xf32> to vector<8x256xf32>
    %59 = arith.addf %57, %58 : vector<8x256xf32>
    %cst_30 = arith.constant 0.000000e+00 : f32
    %60 = vector.broadcast %cst_30 : f32 to vector<8x256xf32>
    %61 = arith.maximumf %59, %60 : vector<8x256xf32>
    %c0_31 = arith.constant 0 : index
    %c0_32 = arith.constant 0 : index
    %c0_33 = arith.constant 0 : index
    %62 = vector.load %arg7[%c0_31, %c0_32, %c0_33] : memref<2x256x256xbf16, #tpu.memory_space<vmem>>, vector<1x256x256xbf16>
    %63 = vector.shape_cast %62 : vector<1x256x256xbf16> to vector<256x256xbf16>
    %64 = arith.truncf %61 : vector<8x256xf32> to vector<8x256xbf16>
    %cst_34 = arith.constant dense<0.000000e+00> : vector<8x256xf32>
    %65 = tpu.matmul %64, %63, %cst_34 {dimension_numbers = #tpu.dot_dimension_numbers<[1], [0], [0], [1], [0, 0, 1, 1], [], []>} : vector<8x256xbf16>, vector<256x256xbf16>, vector<8x256xf32> -> vector<8x256xf32>
    %66 = vector.broadcast %5 : vector<1x256xf32> to vector<8x256xf32>
    %67 = arith.addf %65, %66 : vector<8x256xf32>
    %cst_35 = arith.constant 0.000000e+00 : f32
    %68 = vector.broadcast %cst_35 : f32 to vector<8x256xf32>
    %69 = arith.maximumf %67, %68 : vector<8x256xf32>
    %c1_36 = arith.constant 1 : index
    %c0_37 = arith.constant 0 : index
    %c0_38 = arith.constant 0 : index
    %70 = vector.load %arg7[%c1_36, %c0_37, %c0_38] : memref<2x256x256xbf16, #tpu.memory_space<vmem>>, vector<1x256x256xbf16>
    %71 = vector.shape_cast %70 : vector<1x256x256xbf16> to vector<256x256xbf16>
    %72 = arith.truncf %69 : vector<8x256xf32> to vector<8x256xbf16>
    %cst_39 = arith.constant dense<0.000000e+00> : vector<8x256xf32>
    %73 = tpu.matmul %72, %71, %cst_39 {dimension_numbers = #tpu.dot_dimension_numbers<[1], [0], [0], [1], [0, 0, 1, 1], [], []>} : vector<8x256xbf16>, vector<256x256xbf16>, vector<8x256xf32> -> vector<8x256xf32>
    %74 = vector.broadcast %6 : vector<1x256xf32> to vector<8x256xf32>
    %75 = arith.addf %73, %74 : vector<8x256xf32>
    %cst_40 = arith.constant 5.000000e-01 : f32
    %76 = vector.broadcast %cst_40 : f32 to vector<8x256xf32>
    %77 = arith.mulf %76, %75 : vector<8x256xf32>
    %78 = math.tanh %77 : vector<8x256xf32>
    %cst_41 = arith.constant 1.000000e+00 : f32
    %79 = vector.broadcast %cst_41 : f32 to vector<8x256xf32>
    %80 = arith.addf %78, %79 : vector<8x256xf32>
    %cst_42 = arith.constant 5.000000e-01 : f32
    %81 = vector.broadcast %cst_42 : f32 to vector<8x256xf32>
    %82 = arith.mulf %81, %80 : vector<8x256xf32>
    %c0_43 = arith.constant 0 : index
    %c0_44 = arith.constant 0 : index
    %83 = vector.load %arg9[%c0_43, %c0_44] : memref<8x256xf32, #tpu.memory_space<vmem>>, vector<8x256xf32>
    tpu.vector_store %arg9[%c0_43, %c0_44], %82 {strides = array<i32>} : memref<8x256xf32, #tpu.memory_space<vmem>>, vector<8x256xf32>,
    %c0_45 = arith.constant 0 : index
    %c0_46 = arith.constant 0 : index
    %84 = vector.load %arg10[%c0_45, %c0_46] : memref<8x256xf32, #tpu.memory_space<vmem>>, vector<8x256xf32>
    tpu.vector_store %arg10[%c0_45, %c0_46], %42 {strides = array<i32>} : memref<8x256xf32, #tpu.memory_space<vmem>>, vector<8x256xf32>,
    return
  }
}

</mosaic_0001>

<llo_original>
// kernel: vae_forward.1
$region0: #{vae_forward.1}
  #allocation0 [shape = 'u32[]', space=smem, size = 0x4, offset = 0x4, fixed_abs, tag = 'smem constant byte address 0x4 - core index']
  #allocation1 [shape = 'u32[72,128]{1,0:T(1,128)}', space=vmem, size = 0x9000, scoped, tag = 'internal scratch']
  %s0 = inlined_call_operand.vmem [shape: f32[8,256], index: 0, kind: input, shape index: {}]
  %s1 = inlined_call_operand.vmem [shape: f32[8,8], index: 1, kind: input, shape index: {}]
  %s2 = inlined_call_operand.hbm [shape: bf16[256,1024], index: 2, kind: input, shape index: {}]
  %s3 = inlined_call_operand.hbm [shape: bf16[256,512], index: 3, kind: input, shape index: {}]
  %s4 = inlined_call_operand.vmem [shape: bf16[128,256], index: 4, kind: input, shape index: {}]
  %s5 = inlined_call_operand.vmem [shape: bf16[128,128], index: 5, kind: input, shape index: {}]
  %s6 = inlined_call_operand.vmem [shape: bf16[128,256], index: 6, kind: input, shape index: {}]
  %s7 = inlined_call_operand.hbm [shape: bf16[2,256,256], index: 7, kind: input, shape index: {}]
  %s8 = inlined_call_operand.vmem [shape: f32[8,1024], index: 8, kind: input, shape index: {}]
  %s9 = inlined_call_operand.hbm [shape: f32[8,256], index: 9, kind: output, shape index: {0}]
  %s10 = inlined_call_operand.vmem [shape: f32[8,256], index: 10, kind: output, shape index: {1}]
  %11 = xla_tuple %s9, %s10
  %s12 = sld [smem:[#allocation0]]
  $region66: #{vae_forward.1} parent=0
    _
  %s14 = ssub.s32 1, %s12
  %s15 = scalar_select 0, %s14, %s12
  $region1: #{vae_forward.1} parent=0
    #allocation2 [shape = 'u8[524288]{0}', space=vmem, size = 0x80000, scoped, tag = 'input window, operand 2, single buffered']
    #allocation3 [shape = 's32[1]{0}', space=sflag, size = 0x4, scoped, tag = 'scoped memory for vae_forward.1']
    #allocation4 [shape = 's32[1]{0}', space=sflag, size = 0x4, scoped, tag = 'scoped memory for vae_forward.1']
    #allocation5 [shape = 'u8[262144]{0}', space=vmem, size = 0x40000, scoped, tag = 'input window, operand 3, single buffered']
    #allocation6 [shape = 's32[1]{0}', space=sflag, size = 0x4, scoped, tag = 'scoped memory for vae_forward.1']
    #allocation7 [shape = 'u8[262144]{0}', space=vmem, size = 0x40000, scoped, tag = 'input window, operand 7, single buffered']
    #allocation8 [shape = 'u8[8192]{0}', space=vmem, size = 0x2000, scoped, tag = 'output window, operand 0, single buffered']
    %16 = vsyncpa [#allocation3], 0
    %17 = vsyncpa [#allocation6], 0
    %18 = vsyncpa [#allocation4], 0
    // Predicated region
    $region2: #{vae_forward.1} parent=1 // pred_check
      _
    $region3: #{vae_forward.1} parent=1 // pred_check_branch
      %20 = sbr.rel (0) target = $region5
    $region4: #{vae_forward.1} parent=1 // pred_region
      _
    $region5: #{vae_forward.1} parent=1 // pred_fallthru
      _
    // Predicated region
    $region6: #{vae_forward.1} parent=1 // pred_check
      _
    $region7: #{vae_forward.1} parent=1 // pred_check_branch
      %22 = sbr.rel (0) target = $region9
    $region8: #{vae_forward.1} parent=1 // pred_region
      _
    $region9: #{vae_forward.1} parent=1 // pred_fallthru
      _
    // Predicated region
    $region10: #{vae_forward.1} parent=1 // pred_check
      _
    $region11: #{vae_forward.1} parent=1 // pred_check_branch
      %24 = sbr.rel (0) target = $region13
    $region12: #{vae_forward.1} parent=1 // pred_region
      %26 = vsyncadd [#allocation3], 0
      %s27 = sshll.u32 %s2, 4
      %s28 = int_to_ptr.hbm [resolvable:$true] %s27
      %s29 = sshll.u32 [#allocation2], 4
      %s30 = int_to_ptr.vmem [resolvable:$true] %s29
      %35 = dma.hbm_to_vmem [thread:$0]  %s28, 16384, %s30, [#allocation3], 512, 512, 32
    $region13: #{vae_forward.1} parent=1 // pred_fallthru
      _
    // Predicated region
    $region14: #{vae_forward.1} parent=1 // pred_check
      _
    $region15: #{vae_forward.1} parent=1 // pred_check_branch
      %37 = sbr.rel (0) target = $region17
    $region16: #{vae_forward.1} parent=1 // pred_region
      %39 = vsyncadd [#allocation6], 0
      %s40 = sshll.u32 %s3, 4
      %s41 = int_to_ptr.hbm [resolvable:$true] %s40
      %s42 = sshll.u32 [#allocation5], 4
      %s43 = int_to_ptr.vmem [resolvable:$true] %s42
      %48 = dma.hbm_to_vmem [thread:$0]  %s41, 8192, %s43, [#allocation6], 256, 256, 16
    $region17: #{vae_forward.1} parent=1 // pred_fallthru
      _
    // Predicated region
    $region18: #{vae_forward.1} parent=1 // pred_check
      _
    $region19: #{vae_forward.1} parent=1 // pred_check_branch
      %50 = sbr.rel (0) target = $region21
    $region20: #{vae_forward.1} parent=1 // pred_region
      _
    $region21: #{vae_forward.1} parent=1 // pred_fallthru
      _
    // Predicated region
    $region22: #{vae_forward.1} parent=1 // pred_check
      _
    $region23: #{vae_forward.1} parent=1 // pred_check_branch
      %52 = sbr.rel (0) target = $region25
    $region24: #{vae_forward.1} parent=1 // pred_region
      _
    $region25: #{vae_forward.1} parent=1 // pred_fallthru
      _
    // Predicated region
    $region26: #{vae_forward.1} parent=1 // pred_check
      _
    $region27: #{vae_forward.1} parent=1 // pred_check_branch
      %54 = sbr.rel (0) target = $region29
    $region28: #{vae_forward.1} parent=1 // pred_region
      _
    $region29: #{vae_forward.1} parent=1 // pred_fallthru
      _
    // Predicated region
    $region30: #{vae_forward.1} parent=1 // pred_check
      _
    $region31: #{vae_forward.1} parent=1 // pred_check_branch
      %56 = sbr.rel (0) target = $region33
    $region32: #{vae_forward.1} parent=1 // pred_region
      %58 = vsyncadd [#allocation6], 0
      %s59 = sshll.u32 %s7, 4
      %s60 = int_to_ptr.hbm [resolvable:$true] %s59
      %s61 = sshll.u32 [#allocation7], 4
      %s62 = int_to_ptr.vmem [resolvable:$true] %s61
      %67 = dma.hbm_to_vmem [thread:$0]  %s60, 8192, %s62, [#allocation6], 128, 128, 8
    $region33: #{vae_forward.1} parent=1 // pred_fallthru
      _
    // Predicated region
    $region34: #{vae_forward.1} parent=1 // pred_check
      _
    $region35: #{vae_forward.1} parent=1 // pred_check_branch
      %69 = sbr.rel (0) target = $region37
    $region36: #{vae_forward.1} parent=1 // pred_region
      _
    $region37: #{vae_forward.1} parent=1 // pred_fallthru
      _
    // Predicated region
    $region38: #{vae_forward.1} parent=1 // pred_check
      _
    $region39: #{vae_forward.1} parent=1 // pred_check_branch
      %71 = sbr.rel (0) target = $region41
    $region40: #{vae_forward.1} parent=1 // pred_region
      %73 = dma.done [#allocation3], 16384
    $region41: #{vae_forward.1} parent=1 // pred_fallthru
      _
    // Predicated region
    $region42: #{vae_forward.1} parent=1 // pred_check
      _
    $region43: #{vae_forward.1} parent=1 // pred_check_branch
      %75 = sbr.rel (0) target = $region45
    $region44: #{vae_forward.1} parent=1 // pred_region
      %77 = dma.done [#allocation6], 8192
    $region45: #{vae_forward.1} parent=1 // pred_fallthru
      _
    // Predicated region
    $region46: #{vae_forward.1} parent=1 // pred_check
      _
    $region47: #{vae_forward.1} parent=1 // pred_check_branch
      %79 = sbr.rel (0) target = $region49
    $region48: #{vae_forward.1} parent=1 // pred_region
      %81 = dma.done [#allocation6], 8192
    $region49: #{vae_forward.1} parent=1 // pred_fallthru
      _
    %v82 = vld [vmem:[%s8] ss:$8 sm:$0xf]
    %v83 = vld [vmem:[%s8] ss:$8 sm:$0xf0]
    %v84 = vor.u32 %v82, %v83
    %s85 = scalar_lea.vmem %s8, 1
    %v86 = vld [vmem:[%s85] ss:$8 sm:$0xf]
    %s87 = scalar_lea.vmem %s8, 2
    %v88 = vld [vmem:[%s87] ss:$8 sm:$0x3]
    %v89 = vld [vmem:[%s8 + $0x3] ss:$0 sm:$0xff]
    %s90 = scalar_lea.vmem %s8, 4
    %v91 = vld [vmem:[%s90] ss:$8 sm:$0x3]
    %s92 = scalar_lea.vmem %s8, 5
    %v93 = vld [vmem:[%s92] ss:$8 sm:$0x3]
    %s94 = scalar_lea.vmem %s8, 6
    %v95 = vld [vmem:[%s94] ss:$8 sm:$0x3]
    %v96 = vld [vmem:[%s0] sm:$0xff]
    %v97 = vld [vmem:[%s0 + $0x8] sm:$0xff]
    %v98 = vld [vmem:[#allocation2] sm:$0xff]
    %v99 = vld [vmem:[#allocation2 + $0x8] sm:$0xff]
    %v100 = vld [vmem:[#allocation2 + $0x10] sm:$0xff]
    %v101 = vld [vmem:[#allocation2 + $0x18] sm:$0xff]
    %v102 = vld [vmem:[#allocation2 + $0x20] sm:$0xff]
    %v103 = vld [vmem:[#allocation2 + $0x28] sm:$0xff]
    %v104 = vld [vmem:[#allocation2 + $0x30] sm:$0xff]
    %v105 = vld [vmem:[#allocation2 + $0x38] sm:$0xff]
    %v106 = vld [vmem:[#allocation2 + $0x40] sm:$0xff]
    %v107 = vld [vmem:[#allocation2 + $0x48] sm:$0xff]
    %v108 = vld [vmem:[#allocation2 + $0x50] sm:$0xff]
    %v109 = vld [vmem:[#allocation2 + $0x58] sm:$0xff]
    %v110 = vld [vmem:[#allocation2 + $0x60] sm:$0xff]
    %v111 = vld [vmem:[#allocation2 + $0x68] sm:$0xff]
    %v112 = vld [vmem:[#allocation2 + $0x70] sm:$0xff]
    %v113 = vld [vmem:[#allocation2 + $0x78] sm:$0xff]
    %v114 = vld [vmem:[#allocation2 + $0x80] sm:$0xff]
    %v115 = vld [vmem:[#allocation2 + $0x88] sm:$0xff]
    %v116 = vld [vmem:[#allocation2 + $0x90] sm:$0xff]
    %v117 = vld [vmem:[#allocation2 + $0x98] sm:$0xff]
    %v118 = vld [vmem:[#allocation2 + $0xa0] sm:$0xff]
    %v119 = vld [vmem:[#allocation2 + $0xa8] sm:$0xff]
    %v120 = vld [vmem:[#allocation2 + $0xb0] sm:$0xff]
    %v121 = vld [vmem:[#allocation2 + $0xb8] sm:$0xff]
    %v122 = vld [vmem:[#allocation2 + $0xc0] sm:$0xff]
    %v123 = vld [vmem:[#allocation2 + $0xc8] sm:$0xff]
    %v124 = vld [vmem:[#allocation2 + $0xd0] sm:$0xff]
    %v125 = vld [vmem:[#allocation2 + $0xd8] sm:$0xff]
    %v126 = vld [vmem:[#allocation2 + $0xe0] sm:$0xff]
    %v127 = vld [vmem:[#allocation2 + $0xe8] sm:$0xff]
    %v128 = vld [vmem:[#allocation2 + $0xf0] sm:$0xff]
    %v129 = vld [vmem:[#allocation2 + $0xf8] sm:$0xff]
    %v130 = vld [vmem:[#allocation2 + $0x100] sm:$0xff]
    %v131 = vld [vmem:[#allocation2 + $0x108] sm:$0xff]
    %v132 = vld [vmem:[#allocation2 + $0x110] sm:$0xff]
    %v133 = vld [vmem:[#allocation2 + $0x118] sm:$0xff]
    %v134 = vld [vmem:[#allocation2 + $0x120] sm:$0xff]
    %v135 = vld [vmem:[#allocation2 + $0x128] sm:$0xff]
    %v136 = vld [vmem:[#allocation2 + $0x130] sm:$0xff]
    %v137 = vld [vmem:[#allocation2 + $0x138] sm:$0xff]
    %v138 = vld [vmem:[#allocation2 + $0x140] sm:$0xff]
    %v139 = vld [vmem:[#allocation2 + $0x148] sm:$0xff]
    %v140 = vld [vmem:[#allocation2 + $0x150] sm:$0xff]
    %v141 = vld [vmem:[#allocation2 + $0x158] sm:$0xff]
    %v142 = vld [vmem:[#allocation2 + $0x160] sm:$0xff]
    %v143 = vld [vmem:[#allocation2 + $0x168] sm:$0xff]
    %v144 = vld [vmem:[#allocation2 + $0x170] sm:$0xff]
    %v145 = vld [vmem:[#allocation2 + $0x178] sm:$0xff]
    %v146 = vld [vmem:[#allocation2 + $0x180] sm:$0xff]
    %v147 = vld [vmem:[#allocation2 + $0x188] sm:$0xff]
    %v148 = vld [vmem:[#allocation2 + $0x190] sm:$0xff]
    %v149 = vld [vmem:[#allocation2 + $0x198] sm:$0xff]
    %v150 = vld [vmem:[#allocation2 + $0x1a0] sm:$0xff]
    %v151 = vld [vmem:[#allocation2 + $0x1a8] sm:$0xff]
    %v152 = vld [vmem:[#allocation2 + $0x1b0] sm:$0xff]
    %v153 = vld [vmem:[#allocation2 + $0x1b8] sm:$0xff]
    %v154 = vld [vmem:[#allocation2 + $0x1c0] sm:$0xff]
    %v155 = vld [vmem:[#allocation2 + $0x1c8] sm:$0xff]
    %v156 = vld [vmem:[#allocation2 + $0x1d0] sm:$0xff]
    %v157 = vld [vmem:[#allocation2 + $0x1d8] sm:$0xff]
    %v158 = vld [vmem:[#allocation2 + $0x1e0] sm:$0xff]
    %v159 = vld [vmem:[#allocation2 + $0x1e8] sm:$0xff]
    %v160 = vld [vmem:[#allocation2 + $0x1f0] sm:$0xff]
    %v161 = vld [vmem:[#allocation2 + $0x1f8] sm:$0xff]
    %v162 = vld [vmem:[#allocation2 + $0x200] sm:$0xff]
    %v163 = vld [vmem:[#allocation2 + $0x208] sm:$0xff]
    %v164 = vld [vmem:[#allocation2 + $0x210] sm:$0xff]
    %v165 = vld [vmem:[#allocation2 + $0x218] sm:$0xff]
    %v166 = vld [vmem:[#allocation2 + $0x220] sm:$0xff]
    %v167 = vld [vmem:[#allocation2 + $0x228] sm:$0xff]
    %v168 = vld [vmem:[#allocation2 + $0x230] sm:$0xff]
    %v169 = vld [vmem:[#allocation2 + $0x238] sm:$0xff]
    %v170 = vld [vmem:[#allocation2 + $0x240] sm:$0xff]
    %v171 = vld [vmem:[#allocation2 + $0x248] sm:$0xff]
    %v172 = vld [vmem:[#allocation2 + $0x250] sm:$0xff]
    %v173 = vld [vmem:[#allocation2 + $0x258] sm:$0xff]
    %v174 = vld [vmem:[#allocation2 + $0x260] sm:$0xff]
    %v175 = vld [vmem:[#allocation2 + $0x268] sm:$0xff]
    %v176 = vld [vmem:[#allocation2 + $0x270] sm:$0xff]
    %v177 = vld [vmem:[#allocation2 + $0x278] sm:$0xff]
    %v178 = vld [vmem:[#allocation2 + $0x280] sm:$0xff]
    %v179 = vld [vmem:[#allocation2 + $0x288] sm:$0xff]
    %v180 = vld [vmem:[#allocation2 + $0x290] sm:$0xff]
    %v181 = vld [vmem:[#allocation2 + $0x298] sm:$0xff]
    %v182 = vld [vmem:[#allocation2 + $0x2a0] sm:$0xff]
    %v183 = vld [vmem:[#allocation2 + $0x2a8] sm:$0xff]
    %v184 = vld [vmem:[#allocation2 + $0x2b0] sm:$0xff]
    %v185 = vld [vmem:[#allocation2 + $0x2b8] sm:$0xff]
    %v186 = vld [vmem:[#allocation2 + $0x2c0] sm:$0xff]
    %v187 = vld [vmem:[#allocation2 + $0x2c8] sm:$0xff]
    %v188 = vld [vmem:[#allocation2 + $0x2d0] sm:$0xff]
    %v189 = vld [vmem:[#allocation2 + $0x2d8] sm:$0xff]
    %v190 = vld [vmem:[#allocation2 + $0x2e0] sm:$0xff]
    %v191 = vld [vmem:[#allocation2 + $0x2e8] sm:$0xff]
    %v192 = vld [vmem:[#allocation2 + $0x2f0] sm:$0xff]
    %v193 = vld [vmem:[#allocation2 + $0x2f8] sm:$0xff]
    %v194 = vld [vmem:[#allocation2 + $0x300] sm:$0xff]
    %v195 = vld [vmem:[#allocation2 + $0x308] sm:$0xff]
    %v196 = vld [vmem:[#allocation2 + $0x310] sm:$0xff]
    %v197 = vld [vmem:[#allocation2 + $0x318] sm:$0xff]
    %v198 = vld [vmem:[#allocation2 + $0x320] sm:$0xff]
    %v199 = vld [vmem:[#allocation2 + $0x328] sm:$0xff]
    %v200 = vld [vmem:[#allocation2 + $0x330] sm:$0xff]
    %v201 = vld [vmem:[#allocation2 + $0x338] sm:$0xff]
    %v202 = vld [vmem:[#allocation2 + $0x340] sm:$0xff]
    %v203 = vld [vmem:[#allocation2 + $0x348] sm:$0xff]
    %v204 = vld [vmem:[#allocation2 + $0x350] sm:$0xff]
    %v205 = vld [vmem:[#allocation2 + $0x358] sm:$0xff]
    %v206 = vld [vmem:[#allocation2 + $0x360] sm:$0xff]
    %v207 = vld [vmem:[#allocation2 + $0x368] sm:$0xff]
    %v208 = vld [vmem:[#allocation2 + $0x370] sm:$0xff]
    %v209 = vld [vmem:[#allocation2 + $0x378] sm:$0xff]
    %v210 = vld [vmem:[#allocation2 + $0x380] sm:$0xff]
    %v211 = vld [vmem:[#allocation2 + $0x388] sm:$0xff]
    %v212 = vld [vmem:[#allocation2 + $0x390] sm:$0xff]
    %v213 = vld [vmem:[#allocation2 + $0x398] sm:$0xff]
    %v214 = vld [vmem:[#allocation2 + $0x3a0] sm:$0xff]
    %v215 = vld [vmem:[#allocation2 + $0x3a8] sm:$0xff]
    %v216 = vld [vmem:[#allocation2 + $0x3b0] sm:$0xff]
    %v217 = vld [vmem:[#allocation2 + $0x3b8] sm:$0xff]
    %v218 = vld [vmem:[#allocation2 + $0x3c0] sm:$0xff]
    %v219 = vld [vmem:[#allocation2 + $0x3c8] sm:$0xff]
    %v220 = vld [vmem:[#allocation2 + $0x3d0] sm:$0xff]
    %v221 = vld [vmem:[#allocation2 + $0x3d8] sm:$0xff]
    %v222 = vld [vmem:[#allocation2 + $0x3e0] sm:$0xff]
    %v223 = vld [vmem:[#allocation2 + $0x3e8] sm:$0xff]
    %v224 = vld [vmem:[#allocation2 + $0x3f0] sm:$0xff]
    %v225 = vld [vmem:[#allocation2 + $0x3f8] sm:$0xff]
    %v226 = vpack.c.bf16 %v96, %v96
    %v227 = vpack.c.bf16 %v97, %v97
    %v229 = vperm.slane %v84, 0
    %v230 = vperm.slane %v84, 1
    %v231 = vperm.slane %v84, 2
    %v232 = vperm.slane %v84, 3
    %v233 = vperm.slane %v84, 4
    %v234 = vperm.slane %v84, 5
    %v235 = vperm.slane %v84, 6
    %v236 = vperm.slane %v84, 7
    %v373 = vunpack.c.l.b16 %v98
    %v374 = vunpack.c.h.b16 %v98
    %v375 = vunpack.c.l.b16 %v99
    %v376 = vunpack.c.h.b16 %v99
    %v377 = vunpack.c.l.b16 %v100
    %v378 = vunpack.c.h.b16 %v100
    %v379 = vunpack.c.l.b16 %v101
    %v380 = vunpack.c.h.b16 %v101
    %v381 = vunpack.c.l.b16 %v102
    %v382 = vunpack.c.h.b16 %v102
    %v383 = vunpack.c.l.b16 %v103
    %v384 = vunpack.c.h.b16 %v103
    %v385 = vunpack.c.l.b16 %v104
    %v386 = vunpack.c.h.b16 %v104
    %v387 = vunpack.c.l.b16 %v105
    %v388 = vunpack.c.h.b16 %v105
    %v389 = vunpack.c.l.b16 %v106
    %v390 = vunpack.c.h.b16 %v106
    %v391 = vunpack.c.l.b16 %v107
    %v392 = vunpack.c.h.b16 %v107
    %v393 = vunpack.c.l.b16 %v108
    %v394 = vunpack.c.h.b16 %v108
    %v395 = vunpack.c.l.b16 %v109
    %v396 = vunpack.c.h.b16 %v109
    %v397 = vunpack.c.l.b16 %v110
    %v398 = vunpack.c.h.b16 %v110
    %v399 = vunpack.c.l.b16 %v111
    %v400 = vunpack.c.h.b16 %v111
    %v401 = vunpack.c.l.b16 %v112
    %v402 = vunpack.c.h.b16 %v112
    %v403 = vunpack.c.l.b16 %v113
    %v404 = vunpack.c.h.b16 %v113
    %v405 = vunpack.c.l.b16 %v114
    %v406 = vunpack.c.h.b16 %v114
    %v407 = vunpack.c.l.b16 %v115
    %v408 = vunpack.c.h.b16 %v115
    %v409 = vunpack.c.l.b16 %v116
    %v410 = vunpack.c.h.b16 %v116
    %v411 = vunpack.c.l.b16 %v117
    %v412 = vunpack.c.h.b16 %v117
    %v413 = vunpack.c.l.b16 %v118
    %v414 = vunpack.c.h.b16 %v118
    %v415 = vunpack.c.l.b16 %v119
    %v416 = vunpack.c.h.b16 %v119
    %v417 = vunpack.c.l.b16 %v120
    %v418 = vunpack.c.h.b16 %v120
    %v419 = vunpack.c.l.b16 %v121
    %v420 = vunpack.c.h.b16 %v121
    %v421 = vunpack.c.l.b16 %v122
    %v422 = vunpack.c.h.b16 %v122
    %v423 = vunpack.c.l.b16 %v123
    %v424 = vunpack.c.h.b16 %v123
    %v425 = vunpack.c.l.b16 %v124
    %v426 = vunpack.c.h.b16 %v124
    %v427 = vunpack.c.l.b16 %v125
    %v428 = vunpack.c.h.b16 %v125
    %v429 = vunpack.c.l.b16 %v126
    %v430 = vunpack.c.h.b16 %v126
    %v431 = vunpack.c.l.b16 %v127
    %v432 = vunpack.c.h.b16 %v127
    %v433 = vunpack.c.l.b16 %v128
    %v434 = vunpack.c.h.b16 %v128
    %v435 = vunpack.c.l.b16 %v129
    %v436 = vunpack.c.h.b16 %v129
    %v437 = vunpack.c.l.b16 %v130
    %v438 = vunpack.c.h.b16 %v130
    %v439 = vunpack.c.l.b16 %v131
    %v440 = vunpack.c.h.b16 %v131
    %v441 = vunpack.c.l.b16 %v132
    %v442 = vunpack.c.h.b16 %v132
    %v443 = vunpack.c.l.b16 %v133
    %v444 = vunpack.c.h.b16 %v133
    %v445 = vunpack.c.l.b16 %v134
    %v446 = vunpack.c.h.b16 %v134
    %v447 = vunpack.c.l.b16 %v135
    %v448 = vunpack.c.h.b16 %v135
    %v449 = vunpack.c.l.b16 %v136
    %v450 = vunpack.c.h.b16 %v136
    %v451 = vunpack.c.l.b16 %v137
    %v452 = vunpack.c.h.b16 %v137
    %v453 = vunpack.c.l.b16 %v138
    %v454 = vunpack.c.h.b16 %v138
    %v455 = vunpack.c.l.b16 %v139
    %v456 = vunpack.c.h.b16 %v139
    %v457 = vunpack.c.l.b16 %v140
    %v458 = vunpack.c.h.b16 %v140
    %v459 = vunpack.c.l.b16 %v141
    %v460 = vunpack.c.h.b16 %v141
    %v461 = vunpack.c.l.b16 %v142
    %v462 = vunpack.c.h.b16 %v142
    %v463 = vunpack.c.l.b16 %v143
    %v464 = vunpack.c.h.b16 %v143
    %v465 = vunpack.c.l.b16 %v144
    %v466 = vunpack.c.h.b16 %v144
    %v467 = vunpack.c.l.b16 %v145
    %v468 = vunpack.c.h.b16 %v145
    %v469 = vunpack.c.l.b16 %v146
    %v470 = vunpack.c.h.b16 %v146
    %v471 = vunpack.c.l.b16 %v147
    %v472 = vunpack.c.h.b16 %v147
    %v473 = vunpack.c.l.b16 %v148
    %v474 = vunpack.c.h.b16 %v148
    %v475 = vunpack.c.l.b16 %v149
    %v476 = vunpack.c.h.b16 %v149
    %v477 = vunpack.c.l.b16 %v150
    %v478 = vunpack.c.h.b16 %v150
    %v479 = vunpack.c.l.b16 %v151
    %v480 = vunpack.c.h.b16 %v151
    %v481 = vunpack.c.l.b16 %v152
    %v482 = vunpack.c.h.b16 %v152
    %v483 = vunpack.c.l.b16 %v153
    %v484 = vunpack.c.h.b16 %v153
    %v485 = vunpack.c.l.b16 %v154
    %v486 = vunpack.c.h.b16 %v154
    %v487 = vunpack.c.l.b16 %v155
    %v488 = vunpack.c.h.b16 %v155
    %v489 = vunpack.c.l.b16 %v156
    %v490 = vunpack.c.h.b16 %v156
    %v491 = vunpack.c.l.b16 %v157
    %v492 = vunpack.c.h.b16 %v157
    %v493 = vunpack.c.l.b16 %v158
    %v494 = vunpack.c.h.b16 %v158
    %v495 = vunpack.c.l.b16 %v159
    %v496 = vunpack.c.h.b16 %v159
    %v497 = vunpack.c.l.b16 %v160
    %v498 = vunpack.c.h.b16 %v160
    %v499 = vunpack.c.l.b16 %v161
    %v500 = vunpack.c.h.b16 %v161
    %v501 = vunpack.c.l.b16 %v162
    %v502 = vunpack.c.h.b16 %v162
    %v503 = vunpack.c.l.b16 %v163
    %v504 = vunpack.c.h.b16 %v163
    %v505 = vunpack.c.l.b16 %v164
    %v506 = vunpack.c.h.b16 %v164
    %v507 = vunpack.c.l.b16 %v165
    %v508 = vunpack.c.h.b16 %v165
    %v509 = vunpack.c.l.b16 %v166
    %v510 = vunpack.c.h.b16 %v166
    %v511 = vunpack.c.l.b16 %v167
    %v512 = vunpack.c.h.b16 %v167
    %v513 = vunpack.c.l.b16 %v168
    %v514 = vunpack.c.h.b16 %v168
    %v515 = vunpack.c.l.b16 %v169
    %v516 = vunpack.c.h.b16 %v169
    %v517 = vunpack.c.l.b16 %v170
    %v518 = vunpack.c.h.b16 %v170
    %v519 = vunpack.c.l.b16 %v171
    %v520 = vunpack.c.h.b16 %v171
    %v521 = vunpack.c.l.b16 %v172
    %v522 = vunpack.c.h.b16 %v172
    %v523 = vunpack.c.l.b16 %v173
    %v524 = vunpack.c.h.b16 %v173
    %v525 = vunpack.c.l.b16 %v174
    %v526 = vunpack.c.h.b16 %v174
    %v527 = vunpack.c.l.b16 %v175
    %v528 = vunpack.c.h.b16 %v175
    %v529 = vunpack.c.l.b16 %v176
    %v530 = vunpack.c.h.b16 %v176
    %v531 = vunpack.c.l.b16 %v177
    %v532 = vunpack.c.h.b16 %v177
    %v533 = vunpack.c.l.b16 %v178
    %v534 = vunpack.c.h.b16 %v178
    %v535 = vunpack.c.l.b16 %v179
    %v536 = vunpack.c.h.b16 %v179
    %v537 = vunpack.c.l.b16 %v180
    %v538 = vunpack.c.h.b16 %v180
    %v539 = vunpack.c.l.b16 %v181
    %v540 = vunpack.c.h.b16 %v181
    %v541 = vunpack.c.l.b16 %v182
    %v542 = vunpack.c.h.b16 %v182
    %v543 = vunpack.c.l.b16 %v183
    %v544 = vunpack.c.h.b16 %v183
    %v545 = vunpack.c.l.b16 %v184
    %v546 = vunpack.c.h.b16 %v184
    %v547 = vunpack.c.l.b16 %v185
    %v548 = vunpack.c.h.b16 %v185
    %v549 = vunpack.c.l.b16 %v186
    %v550 = vunpack.c.h.b16 %v186
    %v551 = vunpack.c.l.b16 %v187
    %v552 = vunpack.c.h.b16 %v187
    %v553 = vunpack.c.l.b16 %v188
    %v554 = vunpack.c.h.b16 %v188
    %v555 = vunpack.c.l.b16 %v189
    %v556 = vunpack.c.h.b16 %v189
    %v557 = vunpack.c.l.b16 %v190
    %v558 = vunpack.c.h.b16 %v190
    %v559 = vunpack.c.l.b16 %v191
    %v560 = vunpack.c.h.b16 %v191
    %v561 = vunpack.c.l.b16 %v192
    %v562 = vunpack.c.h.b16 %v192
    %v563 = vunpack.c.l.b16 %v193
    %v564 = vunpack.c.h.b16 %v193
    %v565 = vunpack.c.l.b16 %v194
    %v566 = vunpack.c.h.b16 %v194
    %v567 = vunpack.c.l.b16 %v195
    %v568 = vunpack.c.h.b16 %v195
    %v569 = vunpack.c.l.b16 %v196
    %v570 = vunpack.c.h.b16 %v196
    %v571 = vunpack.c.l.b16 %v197
    %v572 = vunpack.c.h.b16 %v197
    %v573 = vunpack.c.l.b16 %v198
    %v574 = vunpack.c.h.b16 %v198
    %v575 = vunpack.c.l.b16 %v199
    %v576 = vunpack.c.h.b16 %v199
    %v577 = vunpack.c.l.b16 %v200
    %v578 = vunpack.c.h.b16 %v200
    %v579 = vunpack.c.l.b16 %v201
    %v580 = vunpack.c.h.b16 %v201
    %v581 = vunpack.c.l.b16 %v202
    %v582 = vunpack.c.h.b16 %v202
    %v583 = vunpack.c.l.b16 %v203
    %v584 = vunpack.c.h.b16 %v203
    %v585 = vunpack.c.l.b16 %v204
    %v586 = vunpack.c.h.b16 %v204
    %v587 = vunpack.c.l.b16 %v205
    %v588 = vunpack.c.h.b16 %v205
    %v589 = vunpack.c.l.b16 %v206
    %v590 = vunpack.c.h.b16 %v206
    %v591 = vunpack.c.l.b16 %v207
    %v592 = vunpack.c.h.b16 %v207
    %v593 = vunpack.c.l.b16 %v208
    %v594 = vunpack.c.h.b16 %v208
    %v595 = vunpack.c.l.b16 %v209
    %v596 = vunpack.c.h.b16 %v209
    %v597 = vunpack.c.l.b16 %v210
    %v598 = vunpack.c.h.b16 %v210
    %v599 = vunpack.c.l.b16 %v211
    %v600 = vunpack.c.h.b16 %v211
    %v601 = vunpack.c.l.b16 %v212
    %v602 = vunpack.c.h.b16 %v212
    %v603 = vunpack.c.l.b16 %v213
    %v604 = vunpack.c.h.b16 %v213
    %v605 = vunpack.c.l.b16 %v214
    %v606 = vunpack.c.h.b16 %v214
    %v607 = vunpack.c.l.b16 %v215
    %v608 = vunpack.c.h.b16 %v215
    %v609 = vunpack.c.l.b16 %v216
    %v610 = vunpack.c.h.b16 %v216
    %v611 = vunpack.c.l.b16 %v217
    %v612 = vunpack.c.h.b16 %v217
    %v613 = vunpack.c.l.b16 %v218
    %v614 = vunpack.c.h.b16 %v218
    %v615 = vunpack.c.l.b16 %v219
    %v616 = vunpack.c.h.b16 %v219
    %v617 = vunpack.c.l.b16 %v220
    %v618 = vunpack.c.h.b16 %v220
    %v619 = vunpack.c.l.b16 %v221
    %v620 = vunpack.c.h.b16 %v221
    %v621 = vunpack.c.l.b16 %v222
    %v622 = vunpack.c.h.b16 %v222
    %v623 = vunpack.c.l.b16 %v223
    %v624 = vunpack.c.h.b16 %v223
    %v625 = vunpack.c.l.b16 %v224
    %v626 = vunpack.c.h.b16 %v224
    %v627 = vunpack.c.l.b16 %v225
    %v628 = vunpack.c.h.b16 %v225
    %v629 = vpack.c.b16 %v381, %v373
    %v630 = vpack.c.b16 %v382, %v374
    %v631 = vpack.c.b16 %v383, %v375
    %v632 = vpack.c.b16 %v384, %v376
    %v633 = vpack.c.b16 %v385, %v377
    %v634 = vpack.c.b16 %v386, %v378
    %v635 = vpack.c.b16 %v387, %v379
    %v636 = vpack.c.b16 %v388, %v380
    %v637 = vpack.c.b16 %v397, %v389
    %v638 = vpack.c.b16 %v398, %v390
    %v639 = vpack.c.b16 %v399, %v391
    %v640 = vpack.c.b16 %v400, %v392
    %v641 = vpack.c.b16 %v401, %v393
    %v642 = vpack.c.b16 %v402, %v394
    %v643 = vpack.c.b16 %v403, %v395
    %v644 = vpack.c.b16 %v404, %v396
    %v645 = vpack.c.b16 %v413, %v405
    %v646 = vpack.c.b16 %v414, %v406
    %v647 = vpack.c.b16 %v415, %v407
    %v648 = vpack.c.b16 %v416, %v408
    %v649 = vpack.c.b16 %v417, %v409
    %v650 = vpack.c.b16 %v418, %v410
    %v651 = vpack.c.b16 %v419, %v411
    %v652 = vpack.c.b16 %v420, %v412
    %v653 = vpack.c.b16 %v429, %v421
    %v654 = vpack.c.b16 %v430, %v422
    %v655 = vpack.c.b16 %v431, %v423
    %v656 = vpack.c.b16 %v432, %v424
    %v657 = vpack.c.b16 %v433, %v425
    %v658 = vpack.c.b16 %v434, %v426
    %v659 = vpack.c.b16 %v435, %v427
    %v660 = vpack.c.b16 %v436, %v428
    %v661 = vpack.c.b16 %v445, %v437
    %v662 = vpack.c.b16 %v446, %v438
    %v663 = vpack.c.b16 %v447, %v439
    %v664 = vpack.c.b16 %v448, %v440
    %v665 = vpack.c.b16 %v449, %v441
    %v666 = vpack.c.b16 %v450, %v442
    %v667 = vpack.c.b16 %v451, %v443
    %v668 = vpack.c.b16 %v452, %v444
    %v669 = vpack.c.b16 %v461, %v453
    %v670 = vpack.c.b16 %v462, %v454
    %v671 = vpack.c.b16 %v463, %v455
    %v672 = vpack.c.b16 %v464, %v456
    %v673 = vpack.c.b16 %v465, %v457
    %v674 = vpack.c.b16 %v466, %v458
    %v675 = vpack.c.b16 %v467, %v459
    %v676 = vpack.c.b16 %v468, %v460
    %v677 = vpack.c.b16 %v477, %v469
    %v678 = vpack.c.b16 %v478, %v470
    %v679 = vpack.c.b16 %v479, %v471
    %v680 = vpack.c.b16 %v480, %v472
    %v681 = vpack.c.b16 %v481, %v473
    %v682 = vpack.c.b16 %v482, %v474
    %v683 = vpack.c.b16 %v483, %v475
    %v684 = vpack.c.b16 %v484, %v476
    %v685 = vpack.c.b16 %v493, %v485
    %v686 = vpack.c.b16 %v494, %v486
    %v687 = vpack.c.b16 %v495, %v487
    %v688 = vpack.c.b16 %v496, %v488
    %v689 = vpack.c.b16 %v497, %v489
    %v690 = vpack.c.b16 %v498, %v490
    %v691 = vpack.c.b16 %v499, %v491
    %v692 = vpack.c.b16 %v500, %v492
    %v693 = vpack.c.b16 %v509, %v501
    %v694 = vpack.c.b16 %v510, %v502
    %v695 = vpack.c.b16 %v511, %v503
    %v696 = vpack.c.b16 %v512, %v504
    %v697 = vpack.c.b16 %v513, %v505
    %v698 = vpack.c.b16 %v514, %v506
    %v699 = vpack.c.b16 %v515, %v507
    %v700 = vpack.c.b16 %v516, %v508
    %v701 = vpack.c.b16 %v525, %v517
    %v702 = vpack.c.b16 %v526, %v518
    %v703 = vpack.c.b16 %v527, %v519
    %v704 = vpack.c.b16 %v528, %v520
    %v705 = vpack.c.b16 %v529, %v521
    %v706 = vpack.c.b16 %v530, %v522
    %v707 = vpack.c.b16 %v531, %v523
    %v708 = vpack.c.b16 %v532, %v524
    %v709 = vpack.c.b16 %v541, %v533
    %v710 = vpack.c.b16 %v542, %v534
    %v711 = vpack.c.b16 %v543, %v535
    %v712 = vpack.c.b16 %v544, %v536
    %v713 = vpack.c.b16 %v545, %v537
    %v714 = vpack.c.b16 %v546, %v538
    %v715 = vpack.c.b16 %v547, %v539
    %v716 = vpack.c.b16 %v548, %v540
    %v717 = vpack.c.b16 %v557, %v549
    %v718 = vpack.c.b16 %v558, %v550
    %v719 = vpack.c.b16 %v559, %v551
    %v720 = vpack.c.b16 %v560, %v552
    %v721 = vpack.c.b16 %v561, %v553
    %v722 = vpack.c.b16 %v562, %v554
    %v723 = vpack.c.b16 %v563, %v555
    %v724 = vpack.c.b16 %v564, %v556
    %v725 = vpack.c.b16 %v573, %v565
    %v726 = vpack.c.b16 %v574, %v566
    %v727 = vpack.c.b16 %v575, %v567
    %v728 = vpack.c.b16 %v576, %v568
    %v729 = vpack.c.b16 %v577, %v569
    %v730 = vpack.c.b16 %v578, %v570
    %v731 = vpack.c.b16 %v579, %v571
    %v732 = vpack.c.b16 %v580, %v572
    %v733 = vpack.c.b16 %v589, %v581
    %v734 = vpack.c.b16 %v590, %v582
    %v735 = vpack.c.b16 %v591, %v583
    %v736 = vpack.c.b16 %v592, %v584
    %v737 = vpack.c.b16 %v593, %v585
    %v738 = vpack.c.b16 %v594, %v586
    %v739 = vpack.c.b16 %v595, %v587
    %v740 = vpack.c.b16 %v596, %v588
    %v741 = vpack.c.b16 %v605, %v597
    %v742 = vpack.c.b16 %v606, %v598
    %v743 = vpack.c.b16 %v607, %v599
    %v744 = vpack.c.b16 %v608, %v600
    %v745 = vpack.c.b16 %v609, %v601
    %v746 = vpack.c.b16 %v610, %v602
    %v747 = vpack.c.b16 %v611, %v603
    %v748 = vpack.c.b16 %v612, %v604
    %v749 = vpack.c.b16 %v621, %v613
    %v750 = vpack.c.b16 %v622, %v614
    %v751 = vpack.c.b16 %v623, %v615
    %v752 = vpack.c.b16 %v624, %v616
    %v753 = vpack.c.b16 %v625, %v617
    %v754 = vpack.c.b16 %v626, %v618
    %v755 = vpack.c.b16 %v627, %v619
    %v756 = vpack.c.b16 %v628, %v620
    %885 = vmatpush.bf16.msra.mxu0 %v685
    %886 = vmatpush.bf16.msra.mxu0 %v677
    %887 = vmatpush.bf16.msra.mxu0 %v669
    %888 = vmatpush.bf16.msra.mxu0 %v661
    %889 = vmatpush.bf16.msra.mxu0 %v653
    %890 = vmatpush.bf16.msra.mxu0 %v645
    %891 = vmatpush.bf16.msra.mxu0 %v637
    %892 = vmatpush.bf16.msra.mxu0 %v629
    %893 = vmatmul.bf16.gmra.mxu0 %v226
    %v894 = vpop.f32.mrf.mxu0
    %v895 = vadd.f32 %v229, %v894
    %v896 = vpop.f32.mrf.mxu0
    %897 = vdwg.mxu0
    %898 = vmatpush.bf16.msra.mxu0 %v749
    %899 = vmatpush.bf16.msra.mxu0 %v741
    %900 = vmatpush.bf16.msra.mxu0 %v733
    %901 = vmatpush.bf16.msra.mxu0 %v725
    %902 = vmatpush.bf16.msra.mxu0 %v717
    %903 = vmatpush.bf16.msra.mxu0 %v709
    %904 = vmatpush.bf16.msra.mxu0 %v701
    %905 = vmatpush.bf16.msra.mxu0 %v693
    %906 = vmatmul.bf16.gmra.mxu0 %v227
    %v907 = vpop.f32.mrf.mxu0
    %v908 = vadd.f32 %v895, %v907
    %v909 = vpop.f32.mrf.mxu0
    %910 = vdwg.mxu0
    %911 = vmatpush.bf16.msra.mxu0 %v686
    %912 = vmatpush.bf16.msra.mxu0 %v678
    %913 = vmatpush.bf16.msra.mxu0 %v670
    %914 = vmatpush.bf16.msra.mxu0 %v662
    %915 = vmatpush.bf16.msra.mxu0 %v654
    %916 = vmatpush.bf16.msra.mxu0 %v646
    %917 = vmatpush.bf16.msra.mxu0 %v638
    %918 = vmatpush.bf16.msra.mxu0 %v630
    %919 = vmatmul.bf16.gmra.mxu0 %v226
    %v920 = vpop.f32.mrf.mxu0
    %v921 = vadd.f32 %v230, %v920
    %v922 = vpop.f32.mrf.mxu0
    %923 = vdwg.mxu0
    %924 = vmatpush.bf16.msra.mxu0 %v750
    %925 = vmatpush.bf16.msra.mxu0 %v742
    %926 = vmatpush.bf16.msra.mxu0 %v734
    %927 = vmatpush.bf16.msra.mxu0 %v726
    %928 = vmatpush.bf16.msra.mxu0 %v718
    %929 = vmatpush.bf16.msra.mxu0 %v710
    %930 = vmatpush.bf16.msra.mxu0 %v702
    %931 = vmatpush.bf16.msra.mxu0 %v694
    %932 = vmatmul.bf16.gmra.mxu0 %v227
    %v933 = vpop.f32.mrf.mxu0
    %v934 = vadd.f32 %v921, %v933
    %v935 = vpop.f32.mrf.mxu0
    %936 = vdwg.mxu0
    %937 = vmatpush.bf16.msra.mxu0 %v687
    %938 = vmatpush.bf16.msra.mxu0 %v679
    %939 = vmatpush.bf16.msra.mxu0 %v671
    %940 = vmatpush.bf16.msra.mxu0 %v663
    %941 = vmatpush.bf16.msra.mxu0 %v655
    %942 = vmatpush.bf16.msra.mxu0 %v647
    %943 = vmatpush.bf16.msra.mxu0 %v639
    %944 = vmatpush.bf16.msra.mxu0 %v631
    %945 = vmatmul.bf16.gmra.mxu0 %v226
    %v946 = vpop.f32.mrf.mxu0
    %v947 = vadd.f32 %v231, %v946
    %v948 = vpop.f32.mrf.mxu0
    %949 = vdwg.mxu0
    %950 = vmatpush.bf16.msra.mxu0 %v751
    %951 = vmatpush.bf16.msra.mxu0 %v743
    %952 = vmatpush.bf16.msra.mxu0 %v735
    %953 = vmatpush.bf16.msra.mxu0 %v727
    %954 = vmatpush.bf16.msra.mxu0 %v719
    %955 = vmatpush.bf16.msra.mxu0 %v711
    %956 = vmatpush.bf16.msra.mxu0 %v703
    %957 = vmatpush.bf16.msra.mxu0 %v695
    %958 = vmatmul.bf16.gmra.mxu0 %v227
    %v959 = vpop.f32.mrf.mxu0
    %v960 = vadd.f32 %v947, %v959
    %v961 = vpop.f32.mrf.mxu0
    %962 = vdwg.mxu0
    %963 = vmatpush.bf16.msra.mxu0 %v688
    %964 = vmatpush.bf16.msra.mxu0 %v680
    %965 = vmatpush.bf16.msra.mxu0 %v672
    %966 = vmatpush.bf16.msra.mxu0 %v664
    %967 = vmatpush.bf16.msra.mxu0 %v656
    %968 = vmatpush.bf16.msra.mxu0 %v648
    %969 = vmatpush.bf16.msra.mxu0 %v640
    %970 = vmatpush.bf16.msra.mxu0 %v632
    %971 = vmatmul.bf16.gmra.mxu0 %v226
    %v972 = vpop.f32.mrf.mxu0
    %v973 = vadd.f32 %v232, %v972
    %v974 = vpop.f32.mrf.mxu0
    %975 = vdwg.mxu0
    %976 = vmatpush.bf16.msra.mxu0 %v752
    %977 = vmatpush.bf16.msra.mxu0 %v744
    %978 = vmatpush.bf16.msra.mxu0 %v736
    %979 = vmatpush.bf16.msra.mxu0 %v728
    %980 = vmatpush.bf16.msra.mxu0 %v720
    %981 = vmatpush.bf16.msra.mxu0 %v712
    %982 = vmatpush.bf16.msra.mxu0 %v704
    %983 = vmatpush.bf16.msra.mxu0 %v696
    %984 = vmatmul.bf16.gmra.mxu0 %v227
    %v985 = vpop.f32.mrf.mxu0
    %v986 = vadd.f32 %v973, %v985
    %v987 = vpop.f32.mrf.mxu0
    %988 = vdwg.mxu0
    %989 = vmatpush.bf16.msra.mxu0 %v689
    %990 = vmatpush.bf16.msra.mxu0 %v681
    %991 = vmatpush.bf16.msra.mxu0 %v673
    %992 = vmatpush.bf16.msra.mxu0 %v665
    %993 = vmatpush.bf16.msra.mxu0 %v657
    %994 = vmatpush.bf16.msra.mxu0 %v649
    %995 = vmatpush.bf16.msra.mxu0 %v641
    %996 = vmatpush.bf16.msra.mxu0 %v633
    %997 = vmatmul.bf16.gmra.mxu0 %v226
    %v998 = vpop.f32.mrf.mxu0
    %v999 = vadd.f32 %v233, %v998
    %v1000 = vpop.f32.mrf.mxu0
    %1001 = vdwg.mxu0
    %1002 = vmatpush.bf16.msra.mxu0 %v753
    %1003 = vmatpush.bf16.msra.mxu0 %v745
    %1004 = vmatpush.bf16.msra.mxu0 %v737
    %1005 = vmatpush.bf16.msra.mxu0 %v729
    %1006 = vmatpush.bf16.msra.mxu0 %v721
    %1007 = vmatpush.bf16.msra.mxu0 %v713
    %1008 = vmatpush.bf16.msra.mxu0 %v705
    %1009 = vmatpush.bf16.msra.mxu0 %v697
    %1010 = vmatmul.bf16.gmra.mxu0 %v227
    %v1011 = vpop.f32.mrf.mxu0
    %v1012 = vadd.f32 %v999, %v1011
    %v1013 = vpop.f32.mrf.mxu0
    %1014 = vdwg.mxu0
    %1015 = vmatpush.bf16.msra.mxu0 %v690
    %1016 = vmatpush.bf16.msra.mxu0 %v682
    %1017 = vmatpush.bf16.msra.mxu0 %v674
    %1018 = vmatpush.bf16.msra.mxu0 %v666
    %1019 = vmatpush.bf16.msra.mxu0 %v658
    %1020 = vmatpush.bf16.msra.mxu0 %v650
    %1021 = vmatpush.bf16.msra.mxu0 %v642
    %1022 = vmatpush.bf16.msra.mxu0 %v634
    %1023 = vmatmul.bf16.gmra.mxu0 %v226
    %v1024 = vpop.f32.mrf.mxu0
    %v1025 = vadd.f32 %v234, %v1024
    %v1026 = vpop.f32.mrf.mxu0
    %1027 = vdwg.mxu0
    %1028 = vmatpush.bf16.msra.mxu0 %v754
    %1029 = vmatpush.bf16.msra.mxu0 %v746
    %1030 = vmatpush.bf16.msra.mxu0 %v738
    %1031 = vmatpush.bf16.msra.mxu0 %v730
    %1032 = vmatpush.bf16.msra.mxu0 %v722
    %1033 = vmatpush.bf16.msra.mxu0 %v714
    %1034 = vmatpush.bf16.msra.mxu0 %v706
    %1035 = vmatpush.bf16.msra.mxu0 %v698
    %1036 = vmatmul.bf16.gmra.mxu0 %v227
    %v1037 = vpop.f32.mrf.mxu0
    %v1038 = vadd.f32 %v1025, %v1037
    %v1039 = vpop.f32.mrf.mxu0
    %1040 = vdwg.mxu0
    %1041 = vmatpush.bf16.msra.mxu0 %v691
    %1042 = vmatpush.bf16.msra.mxu0 %v683
    %1043 = vmatpush.bf16.msra.mxu0 %v675
    %1044 = vmatpush.bf16.msra.mxu0 %v667
    %1045 = vmatpush.bf16.msra.mxu0 %v659
    %1046 = vmatpush.bf16.msra.mxu0 %v651
    %1047 = vmatpush.bf16.msra.mxu0 %v643
    %1048 = vmatpush.bf16.msra.mxu0 %v635
    %1049 = vmatmul.bf16.gmra.mxu0 %v226
    %v1050 = vpop.f32.mrf.mxu0
    %v1051 = vadd.f32 %v235, %v1050
    %v1052 = vpop.f32.mrf.mxu0
    %1053 = vdwg.mxu0
    %1054 = vmatpush.bf16.msra.mxu0 %v755
    %1055 = vmatpush.bf16.msra.mxu0 %v747
    %1056 = vmatpush.bf16.msra.mxu0 %v739
    %1057 = vmatpush.bf16.msra.mxu0 %v731
    %1058 = vmatpush.bf16.msra.mxu0 %v723
    %1059 = vmatpush.bf16.msra.mxu0 %v715
    %1060 = vmatpush.bf16.msra.mxu0 %v707
    %1061 = vmatpush.bf16.msra.mxu0 %v699
    %1062 = vmatmul.bf16.gmra.mxu0 %v227
    %v1063 = vpop.f32.mrf.mxu0
    %v1064 = vadd.f32 %v1051, %v1063
    %v1065 = vpop.f32.mrf.mxu0
    %1066 = vdwg.mxu0
    %1067 = vmatpush.bf16.msra.mxu0 %v692
    %1068 = vmatpush.bf16.msra.mxu0 %v684
    %1069 = vmatpush.bf16.msra.mxu0 %v676
    %1070 = vmatpush.bf16.msra.mxu0 %v668
    %1071 = vmatpush.bf16.msra.mxu0 %v660
    %1072 = vmatpush.bf16.msra.mxu0 %v652
    %1073 = vmatpush.bf16.msra.mxu0 %v644
    %1074 = vmatpush.bf16.msra.mxu0 %v636
    %1075 = vmatmul.bf16.gmra.mxu0 %v226
    %v1076 = vpop.f32.mrf.mxu0
    %v1077 = vadd.f32 %v236, %v1076
    %v1078 = vpop.f32.mrf.mxu0
    %1079 = vdwg.mxu0
    %1080 = vmatpush.bf16.msra.mxu0 %v756
    %1081 = vmatpush.bf16.msra.mxu0 %v748
    %1082 = vmatpush.bf16.msra.mxu0 %v740
    %1083 = vmatpush.bf16.msra.mxu0 %v732
    %1084 = vmatpush.bf16.msra.mxu0 %v724
    %1085 = vmatpush.bf16.msra.mxu0 %v716
    %1086 = vmatpush.bf16.msra.mxu0 %v708
    %1087 = vmatpush.bf16.msra.mxu0 %v700
    %1088 = vmatmul.bf16.gmra.mxu0 %v227
    %v1089 = vpop.f32.mrf.mxu0
    %v1090 = vadd.f32 %v1077, %v1089
    %v1091 = vpop.f32.mrf.mxu0
    %1092 = vdwg.mxu0
    %v1093 = vmax.f32 %v908, %v960
    %v1094 = vmax.f32 %v934, %v986
    %v1095 = vmax.f32 %v1012, %v1064
    %v1096 = vmax.f32 %v1038, %v1090
    %v1097 = vmax.f32 %v1093, %v1095
    %v1098 = vmax.f32 %v1094, %v1096
    %v1099 = vmax.f32 %v1097, 0.0
    %v1100 = vmax.f32 %v1098, 0.0
    %v1101 = vld [vmem:[#allocation5] sm:$0xff]
    %v1102 = vld [vmem:[#allocation5 + $0x8] sm:$0xff]
    %v1103 = vld [vmem:[#allocation5 + $0x10] sm:$0xff]
    %v1104 = vld [vmem:[#allocation5 + $0x18] sm:$0xff]
    %v1105 = vld [vmem:[#allocation5 + $0x20] sm:$0xff]
    %v1106 = vld [vmem:[#allocation5 + $0x28] sm:$0xff]
    %v1107 = vld [vmem:[#allocation5 + $0x30] sm:$0xff]
    %v1108 = vld [vmem:[#allocation5 + $0x38] sm:$0xff]
    %v1109 = vld [vmem:[#allocation5 + $0x40] sm:$0xff]
    %v1110 = vld [vmem:[#allocation5 + $0x48] sm:$0xff]
    %v1111 = vld [vmem:[#allocation5 + $0x50] sm:$0xff]
    %v1112 = vld [vmem:[#allocation5 + $0x58] sm:$0xff]
    %v1113 = vld [vmem:[#allocation5 + $0x60] sm:$0xff]
    %v1114 = vld [vmem:[#allocation5 + $0x68] sm:$0xff]
    %v1115 = vld [vmem:[#allocation5 + $0x70] sm:$0xff]
    %v1116 = vld [vmem:[#allocation5 + $0x78] sm:$0xff]
    %v1117 = vld [vmem:[#allocation5 + $0x80] sm:$0xff]
    %v1118 = vld [vmem:[#allocation5 + $0x88] sm:$0xff]
    %v1119 = vld [vmem:[#allocation5 + $0x90] sm:$0xff]
    %v1120 = vld [vmem:[#allocation5 + $0x98] sm:$0xff]
    %v1121 = vld [vmem:[#allocation5 + $0xa0] sm:$0xff]
    %v1122 = vld [vmem:[#allocation5 + $0xa8] sm:$0xff]
    %v1123 = vld [vmem:[#allocation5 + $0xb0] sm:$0xff]
    %v1124 = vld [vmem:[#allocation5 + $0xb8] sm:$0xff]
    %v1125 = vld [vmem:[#allocation5 + $0xc0] sm:$0xff]
    %v1126 = vld [vmem:[#allocation5 + $0xc8] sm:$0xff]
    %v1127 = vld [vmem:[#allocation5 + $0xd0] sm:$0xff]
    %v1128 = vld [vmem:[#allocation5 + $0xd8] sm:$0xff]
    %v1129 = vld [vmem:[#allocation5 + $0xe0] sm:$0xff]
    %v1130 = vld [vmem:[#allocation5 + $0xe8] sm:$0xff]
    %v1131 = vld [vmem:[#allocation5 + $0xf0] sm:$0xff]
    %v1132 = vld [vmem:[#allocation5 + $0xf8] sm:$0xff]
    %v1133 = vld [vmem:[#allocation5 + $0x100] sm:$0xff]
    %v1134 = vld [vmem:[#allocation5 + $0x108] sm:$0xff]
    %v1135 = vld [vmem:[#allocation5 + $0x110] sm:$0xff]
    %v1136 = vld [vmem:[#allocation5 + $0x118] sm:$0xff]
    %v1137 = vld [vmem:[#allocation5 + $0x120] sm:$0xff]
    %v1138 = vld [vmem:[#allocation5 + $0x128] sm:$0xff]
    %v1139 = vld [vmem:[#allocation5 + $0x130] sm:$0xff]
    %v1140 = vld [vmem:[#allocation5 + $0x138] sm:$0xff]
    %v1141 = vld [vmem:[#allocation5 + $0x140] sm:$0xff]
    %v1142 = vld [vmem:[#allocation5 + $0x148] sm:$0xff]
    %v1143 = vld [vmem:[#allocation5 + $0x150] sm:$0xff]
    %v1144 = vld [vmem:[#allocation5 + $0x158] sm:$0xff]
    %v1145 = vld [vmem:[#allocation5 + $0x160] sm:$0xff]
    %v1146 = vld [vmem:[#allocation5 + $0x168] sm:$0xff]
    %v1147 = vld [vmem:[#allocation5 + $0x170] sm:$0xff]
    %v1148 = vld [vmem:[#allocation5 + $0x178] sm:$0xff]
    %v1149 = vld [vmem:[#allocation5 + $0x180] sm:$0xff]
    %v1150 = vld [vmem:[#allocation5 + $0x188] sm:$0xff]
    %v1151 = vld [vmem:[#allocation5 + $0x190] sm:$0xff]
    %v1152 = vld [vmem:[#allocation5 + $0x198] sm:$0xff]
    %v1153 = vld [vmem:[#allocation5 + $0x1a0] sm:$0xff]
    %v1154 = vld [vmem:[#allocation5 + $0x1a8] sm:$0xff]
    %v1155 = vld [vmem:[#allocation5 + $0x1b0] sm:$0xff]
    %v1156 = vld [vmem:[#allocation5 + $0x1b8] sm:$0xff]
    %v1157 = vld [vmem:[#allocation5 + $0x1c0] sm:$0xff]
    %v1158 = vld [vmem:[#allocation5 + $0x1c8] sm:$0xff]
    %v1159 = vld [vmem:[#allocation5 + $0x1d0] sm:$0xff]
    %v1160 = vld [vmem:[#allocation5 + $0x1d8] sm:$0xff]
    %v1161 = vld [vmem:[#allocation5 + $0x1e0] sm:$0xff]
    %v1162 = vld [vmem:[#allocation5 + $0x1e8] sm:$0xff]
    %v1163 = vld [vmem:[#allocation5 + $0x1f0] sm:$0xff]
    %v1164 = vld [vmem:[#allocation5 + $0x1f8] sm:$0xff]
    %v1165 = vpack.c.bf16 %v1099, %v1099
    %v1166 = vpack.c.bf16 %v1100, %v1100
    %v1168 = vperm.slane %v86, 0
    %v1169 = vperm.slane %v86, 1
    %v1170 = vperm.slane %v86, 2
    %v1171 = vperm.slane %v86, 3
    %v1240 = vunpack.c.l.b16 %v1101
    %v1241 = vunpack.c.h.b16 %v1101
    %v1242 = vunpack.c.l.b16 %v1102
    %v1243 = vunpack.c.h.b16 %v1102
    %v1244 = vunpack.c.l.b16 %v1103
    %v1245 = vunpack.c.h.b16 %v1103
    %v1246 = vunpack.c.l.b16 %v1104
    %v1247 = vunpack.c.h.b16 %v1104
    %v1248 = vunpack.c.l.b16 %v1105
    %v1249 = vunpack.c.h.b16 %v1105
    %v1250 = vunpack.c.l.b16 %v1106
    %v1251 = vunpack.c.h.b16 %v1106
    %v1252 = vunpack.c.l.b16 %v1107
    %v1253 = vunpack.c.h.b16 %v1107
    %v1254 = vunpack.c.l.b16 %v1108
    %v1255 = vunpack.c.h.b16 %v1108
    %v1256 = vunpack.c.l.b16 %v1109
    %v1257 = vunpack.c.h.b16 %v1109
    %v1258 = vunpack.c.l.b16 %v1110
    %v1259 = vunpack.c.h.b16 %v1110
    %v1260 = vunpack.c.l.b16 %v1111
    %v1261 = vunpack.c.h.b16 %v1111
    %v1262 = vunpack.c.l.b16 %v1112
    %v1263 = vunpack.c.h.b16 %v1112
    %v1264 = vunpack.c.l.b16 %v1113
    %v1265 = vunpack.c.h.b16 %v1113
    %v1266 = vunpack.c.l.b16 %v1114
    %v1267 = vunpack.c.h.b16 %v1114
    %v1268 = vunpack.c.l.b16 %v1115
    %v1269 = vunpack.c.h.b16 %v1115
    %v1270 = vunpack.c.l.b16 %v1116
    %v1271 = vunpack.c.h.b16 %v1116
    %v1272 = vunpack.c.l.b16 %v1117
    %v1273 = vunpack.c.h.b16 %v1117
    %v1274 = vunpack.c.l.b16 %v1118
    %v1275 = vunpack.c.h.b16 %v1118
    %v1276 = vunpack.c.l.b16 %v1119
    %v1277 = vunpack.c.h.b16 %v1119
    %v1278 = vunpack.c.l.b16 %v1120
    %v1279 = vunpack.c.h.b16 %v1120
    %v1280 = vunpack.c.l.b16 %v1121
    %v1281 = vunpack.c.h.b16 %v1121
    %v1282 = vunpack.c.l.b16 %v1122
    %v1283 = vunpack.c.h.b16 %v1122
    %v1284 = vunpack.c.l.b16 %v1123
    %v1285 = vunpack.c.h.b16 %v1123
    %v1286 = vunpack.c.l.b16 %v1124
    %v1287 = vunpack.c.h.b16 %v1124
    %v1288 = vunpack.c.l.b16 %v1125
    %v1289 = vunpack.c.h.b16 %v1125
    %v1290 = vunpack.c.l.b16 %v1126
    %v1291 = vunpack.c.h.b16 %v1126
    %v1292 = vunpack.c.l.b16 %v1127
    %v1293 = vunpack.c.h.b16 %v1127
    %v1294 = vunpack.c.l.b16 %v1128
    %v1295 = vunpack.c.h.b16 %v1128
    %v1296 = vunpack.c.l.b16 %v1129
    %v1297 = vunpack.c.h.b16 %v1129
    %v1298 = vunpack.c.l.b16 %v1130
    %v1299 = vunpack.c.h.b16 %v1130
    %v1300 = vunpack.c.l.b16 %v1131
    %v1301 = vunpack.c.h.b16 %v1131
    %v1302 = vunpack.c.l.b16 %v1132
    %v1303 = vunpack.c.h.b16 %v1132
    %v1304 = vunpack.c.l.b16 %v1133
    %v1305 = vunpack.c.h.b16 %v1133
    %v1306 = vunpack.c.l.b16 %v1134
    %v1307 = vunpack.c.h.b16 %v1134
    %v1308 = vunpack.c.l.b16 %v1135
    %v1309 = vunpack.c.h.b16 %v1135
    %v1310 = vunpack.c.l.b16 %v1136
    %v1311 = vunpack.c.h.b16 %v1136
    %v1312 = vunpack.c.l.b16 %v1137
    %v1313 = vunpack.c.h.b16 %v1137
    %v1314 = vunpack.c.l.b16 %v1138
    %v1315 = vunpack.c.h.b16 %v1138
    %v1316 = vunpack.c.l.b16 %v1139
    %v1317 = vunpack.c.h.b16 %v1139
    %v1318 = vunpack.c.l.b16 %v1140
    %v1319 = vunpack.c.h.b16 %v1140
    %v1320 = vunpack.c.l.b16 %v1141
    %v1321 = vunpack.c.h.b16 %v1141
    %v1322 = vunpack.c.l.b16 %v1142
    %v1323 = vunpack.c.h.b16 %v1142
    %v1324 = vunpack.c.l.b16 %v1143
    %v1325 = vunpack.c.h.b16 %v1143
    %v1326 = vunpack.c.l.b16 %v1144
    %v1327 = vunpack.c.h.b16 %v1144
    %v1328 = vunpack.c.l.b16 %v1145
    %v1329 = vunpack.c.h.b16 %v1145
    %v1330 = vunpack.c.l.b16 %v1146
    %v1331 = vunpack.c.h.b16 %v1146
    %v1332 = vunpack.c.l.b16 %v1147
    %v1333 = vunpack.c.h.b16 %v1147
    %v1334 = vunpack.c.l.b16 %v1148
    %v1335 = vunpack.c.h.b16 %v1148
    %v1336 = vunpack.c.l.b16 %v1149
    %v1337 = vunpack.c.h.b16 %v1149
    %v1338 = vunpack.c.l.b16 %v1150
    %v1339 = vunpack.c.h.b16 %v1150
    %v1340 = vunpack.c.l.b16 %v1151
    %v1341 = vunpack.c.h.b16 %v1151
    %v1342 = vunpack.c.l.b16 %v1152
    %v1343 = vunpack.c.h.b16 %v1152
    %v1344 = vunpack.c.l.b16 %v1153
    %v1345 = vunpack.c.h.b16 %v1153
    %v1346 = vunpack.c.l.b16 %v1154
    %v1347 = vunpack.c.h.b16 %v1154
    %v1348 = vunpack.c.l.b16 %v1155
    %v1349 = vunpack.c.h.b16 %v1155
    %v1350 = vunpack.c.l.b16 %v1156
    %v1351 = vunpack.c.h.b16 %v1156
    %v1352 = vunpack.c.l.b16 %v1157
    %v1353 = vunpack.c.h.b16 %v1157
    %v1354 = vunpack.c.l.b16 %v1158
    %v1355 = vunpack.c.h.b16 %v1158
    %v1356 = vunpack.c.l.b16 %v1159
    %v1357 = vunpack.c.h.b16 %v1159
    %v1358 = vunpack.c.l.b16 %v1160
    %v1359 = vunpack.c.h.b16 %v1160
    %v1360 = vunpack.c.l.b16 %v1161
    %v1361 = vunpack.c.h.b16 %v1161
    %v1362 = vunpack.c.l.b16 %v1162
    %v1363 = vunpack.c.h.b16 %v1162
    %v1364 = vunpack.c.l.b16 %v1163
    %v1365 = vunpack.c.h.b16 %v1163
    %v1366 = vunpack.c.l.b16 %v1164
    %v1367 = vunpack.c.h.b16 %v1164
    %v1368 = vpack.c.b16 %v1244, %v1240
    %v1369 = vpack.c.b16 %v1245, %v1241
    %v1370 = vpack.c.b16 %v1246, %v1242
    %v1371 = vpack.c.b16 %v1247, %v1243
    %v1372 = vpack.c.b16 %v1252, %v1248
    %v1373 = vpack.c.b16 %v1253, %v1249
    %v1374 = vpack.c.b16 %v1254, %v1250
    %v1375 = vpack.c.b16 %v1255, %v1251
    %v1376 = vpack.c.b16 %v1260, %v1256
    %v1377 = vpack.c.b16 %v1261, %v1257
    %v1378 = vpack.c.b16 %v1262, %v1258
    %v1379 = vpack.c.b16 %v1263, %v1259
    %v1380 = vpack.c.b16 %v1268, %v1264
    %v1381 = vpack.c.b16 %v1269, %v1265
    %v1382 = vpack.c.b16 %v1270, %v1266
    %v1383 = vpack.c.b16 %v1271, %v1267
    %v1384 = vpack.c.b16 %v1276, %v1272
    %v1385 = vpack.c.b16 %v1277, %v1273
    %v1386 = vpack.c.b16 %v1278, %v1274
    %v1387 = vpack.c.b16 %v1279, %v1275
    %v1388 = vpack.c.b16 %v1284, %v1280
    %v1389 = vpack.c.b16 %v1285, %v1281
    %v1390 = vpack.c.b16 %v1286, %v1282
    %v1391 = vpack.c.b16 %v1287, %v1283
    %v1392 = vpack.c.b16 %v1292, %v1288
    %v1393 = vpack.c.b16 %v1293, %v1289
    %v1394 = vpack.c.b16 %v1294, %v1290
    %v1395 = vpack.c.b16 %v1295, %v1291
    %v1396 = vpack.c.b16 %v1300, %v1296
    %v1397 = vpack.c.b16 %v1301, %v1297
    %v1398 = vpack.c.b16 %v1302, %v1298
    %v1399 = vpack.c.b16 %v1303, %v1299
    %v1400 = vpack.c.b16 %v1308, %v1304
    %v1401 = vpack.c.b16 %v1309, %v1305
    %v1402 = vpack.c.b16 %v1310, %v1306
    %v1403 = vpack.c.b16 %v1311, %v1307
    %v1404 = vpack.c.b16 %v1316, %v1312
    %v1405 = vpack.c.b16 %v1317, %v1313
    %v1406 = vpack.c.b16 %v1318, %v1314
    %v1407 = vpack.c.b16 %v1319, %v1315
    %v1408 = vpack.c.b16 %v1324, %v1320
    %v1409 = vpack.c.b16 %v1325, %v1321
    %v1410 = vpack.c.b16 %v1326, %v1322
    %v1411 = vpack.c.b16 %v1327, %v1323
    %v1412 = vpack.c.b16 %v1332, %v1328
    %v1413 = vpack.c.b16 %v1333, %v1329
    %v1414 = vpack.c.b16 %v1334, %v1330
    %v1415 = vpack.c.b16 %v1335, %v1331
    %v1416 = vpack.c.b16 %v1340, %v1336
    %v1417 = vpack.c.b16 %v1341, %v1337
    %v1418 = vpack.c.b16 %v1342, %v1338
    %v1419 = vpack.c.b16 %v1343, %v1339
    %v1420 = vpack.c.b16 %v1348, %v1344
    %v1421 = vpack.c.b16 %v1349, %v1345
    %v1422 = vpack.c.b16 %v1350, %v1346
    %v1423 = vpack.c.b16 %v1351, %v1347
    %v1424 = vpack.c.b16 %v1356, %v1352
    %v1425 = vpack.c.b16 %v1357, %v1353
    %v1426 = vpack.c.b16 %v1358, %v1354
    %v1427 = vpack.c.b16 %v1359, %v1355
    %v1428 = vpack.c.b16 %v1364, %v1360
    %v1429 = vpack.c.b16 %v1365, %v1361
    %v1430 = vpack.c.b16 %v1366, %v1362
    %v1431 = vpack.c.b16 %v1367, %v1363
    %1496 = vmatpush.bf16.msra.mxu0 %v1396
    %1497 = vmatpush.bf16.msra.mxu0 %v1392
    %1498 = vmatpush.bf16.msra.mxu0 %v1388
    %1499 = vmatpush.bf16.msra.mxu0 %v1384
    %1500 = vmatpush.bf16.msra.mxu0 %v1380
    %1501 = vmatpush.bf16.msra.mxu0 %v1376
    %1502 = vmatpush.bf16.msra.mxu0 %v1372
    %1503 = vmatpush.bf16.msra.mxu0 %v1368
    %1504 = vmatmul.bf16.gmra.mxu0 %v1165
    %v1505 = vpop.f32.mrf.mxu0
    %v1506 = vadd.f32 %v1168, %v1505
    %v1507 = vpop.f32.mrf.mxu0
    %1508 = vdwg.mxu0
    %1509 = vmatpush.bf16.msra.mxu0 %v1428
    %1510 = vmatpush.bf16.msra.mxu0 %v1424
    %1511 = vmatpush.bf16.msra.mxu0 %v1420
    %1512 = vmatpush.bf16.msra.mxu0 %v1416
    %1513 = vmatpush.bf16.msra.mxu0 %v1412
    %1514 = vmatpush.bf16.msra.mxu0 %v1408
    %1515 = vmatpush.bf16.msra.mxu0 %v1404
    %1516 = vmatpush.bf16.msra.mxu0 %v1400
    %1517 = vmatmul.bf16.gmra.mxu0 %v1166
    %v1518 = vpop.f32.mrf.mxu0
    %v1519 = vadd.f32 %v1506, %v1518
    %v1520 = vpop.f32.mrf.mxu0
    %1521 = vdwg.mxu0
    %1522 = vmatpush.bf16.msra.mxu0 %v1397
    %1523 = vmatpush.bf16.msra.mxu0 %v1393
    %1524 = vmatpush.bf16.msra.mxu0 %v1389
    %1525 = vmatpush.bf16.msra.mxu0 %v1385
    %1526 = vmatpush.bf16.msra.mxu0 %v1381
    %1527 = vmatpush.bf16.msra.mxu0 %v1377
    %1528 = vmatpush.bf16.msra.mxu0 %v1373
    %1529 = vmatpush.bf16.msra.mxu0 %v1369
    %1530 = vmatmul.bf16.gmra.mxu0 %v1165
    %v1531 = vpop.f32.mrf.mxu0
    %v1532 = vadd.f32 %v1169, %v1531
    %v1533 = vpop.f32.mrf.mxu0
    %1534 = vdwg.mxu0
    %1535 = vmatpush.bf16.msra.mxu0 %v1429
    %1536 = vmatpush.bf16.msra.mxu0 %v1425
    %1537 = vmatpush.bf16.msra.mxu0 %v1421
    %1538 = vmatpush.bf16.msra.mxu0 %v1417
    %1539 = vmatpush.bf16.msra.mxu0 %v1413
    %1540 = vmatpush.bf16.msra.mxu0 %v1409
    %1541 = vmatpush.bf16.msra.mxu0 %v1405
    %1542 = vmatpush.bf16.msra.mxu0 %v1401
    %1543 = vmatmul.bf16.gmra.mxu0 %v1166
    %v1544 = vpop.f32.mrf.mxu0
    %v1545 = vadd.f32 %v1532, %v1544
    %v1546 = vpop.f32.mrf.mxu0
    %1547 = vdwg.mxu0
    %1548 = vmatpush.bf16.msra.mxu0 %v1398
    %1549 = vmatpush.bf16.msra.mxu0 %v1394
    %1550 = vmatpush.bf16.msra.mxu0 %v1390
    %1551 = vmatpush.bf16.msra.mxu0 %v1386
    %1552 = vmatpush.bf16.msra.mxu0 %v1382
    %1553 = vmatpush.bf16.msra.mxu0 %v1378
    %1554 = vmatpush.bf16.msra.mxu0 %v1374
    %1555 = vmatpush.bf16.msra.mxu0 %v1370
    %1556 = vmatmul.bf16.gmra.mxu0 %v1165
    %v1557 = vpop.f32.mrf.mxu0
    %v1558 = vadd.f32 %v1170, %v1557
    %v1559 = vpop.f32.mrf.mxu0
    %1560 = vdwg.mxu0
    %1561 = vmatpush.bf16.msra.mxu0 %v1430
    %1562 = vmatpush.bf16.msra.mxu0 %v1426
    %1563 = vmatpush.bf16.msra.mxu0 %v1422
    %1564 = vmatpush.bf16.msra.mxu0 %v1418
    %1565 = vmatpush.bf16.msra.mxu0 %v1414
    %1566 = vmatpush.bf16.msra.mxu0 %v1410
    %1567 = vmatpush.bf16.msra.mxu0 %v1406
    %1568 = vmatpush.bf16.msra.mxu0 %v1402
    %1569 = vmatmul.bf16.gmra.mxu0 %v1166
    %v1570 = vpop.f32.mrf.mxu0
    %v1571 = vadd.f32 %v1558, %v1570
    %v1572 = vpop.f32.mrf.mxu0
    %1573 = vdwg.mxu0
    %1574 = vmatpush.bf16.msra.mxu0 %v1399
    %1575 = vmatpush.bf16.msra.mxu0 %v1395
    %1576 = vmatpush.bf16.msra.mxu0 %v1391
    %1577 = vmatpush.bf16.msra.mxu0 %v1387
    %1578 = vmatpush.bf16.msra.mxu0 %v1383
    %1579 = vmatpush.bf16.msra.mxu0 %v1379
    %1580 = vmatpush.bf16.msra.mxu0 %v1375
    %1581 = vmatpush.bf16.msra.mxu0 %v1371
    %1582 = vmatmul.bf16.gmra.mxu0 %v1165
    %v1583 = vpop.f32.mrf.mxu0
    %v1584 = vadd.f32 %v1171, %v1583
    %v1585 = vpop.f32.mrf.mxu0
    %1586 = vdwg.mxu0
    %1587 = vmatpush.bf16.msra.mxu0 %v1431
    %1588 = vmatpush.bf16.msra.mxu0 %v1427
    %1589 = vmatpush.bf16.msra.mxu0 %v1423
    %1590 = vmatpush.bf16.msra.mxu0 %v1419
    %1591 = vmatpush.bf16.msra.mxu0 %v1415
    %1592 = vmatpush.bf16.msra.mxu0 %v1411
    %1593 = vmatpush.bf16.msra.mxu0 %v1407
    %1594 = vmatpush.bf16.msra.mxu0 %v1403
    %1595 = vmatmul.bf16.gmra.mxu0 %v1166
    %v1596 = vpop.f32.mrf.mxu0
    %v1597 = vadd.f32 %v1584, %v1596
    %v1598 = vpop.f32.mrf.mxu0
    %1599 = vdwg.mxu0
    %v1600 = vmax.f32 %v1519, %v1545
    %v1601 = vmax.f32 %v1571, %v1597
    %v1602 = vmax.f32 %v1600, %v1601
    %v1603 = vmax.f32 %v1602, 0.0
    %v1604 = vld [vmem:[%s4] sm:$0xff]
    %v1605 = vld [vmem:[%s4 + $0x8] sm:$0xff]
    %v1606 = vld [vmem:[%s4 + $0x10] sm:$0xff]
    %v1607 = vld [vmem:[%s4 + $0x18] sm:$0xff]
    %v1608 = vld [vmem:[%s4 + $0x20] sm:$0xff]
    %v1609 = vld [vmem:[%s4 + $0x28] sm:$0xff]
    %v1610 = vld [vmem:[%s4 + $0x30] sm:$0xff]
    %v1611 = vld [vmem:[%s4 + $0x38] sm:$0xff]
    %v1612 = vld [vmem:[%s4 + $0x40] sm:$0xff]
    %v1613 = vld [vmem:[%s4 + $0x48] sm:$0xff]
    %v1614 = vld [vmem:[%s4 + $0x50] sm:$0xff]
    %v1615 = vld [vmem:[%s4 + $0x58] sm:$0xff]
    %v1616 = vld [vmem:[%s4 + $0x60] sm:$0xff]
    %v1617 = vld [vmem:[%s4 + $0x68] sm:$0xff]
    %v1618 = vld [vmem:[%s4 + $0x70] sm:$0xff]
    %v1619 = vld [vmem:[%s4 + $0x78] sm:$0xff]
    %v1620 = vpack.c.bf16 %v1603, %v1603
    %v1622 = vperm.slane %v88, 0
    %v1623 = vperm.slane %v88, 1
    %v1642 = vunpack.c.l.b16 %v1604
    %v1643 = vunpack.c.h.b16 %v1604
    %v1644 = vunpack.c.l.b16 %v1605
    %v1645 = vunpack.c.h.b16 %v1605
    %v1646 = vunpack.c.l.b16 %v1606
    %v1647 = vunpack.c.h.b16 %v1606
    %v1648 = vunpack.c.l.b16 %v1607
    %v1649 = vunpack.c.h.b16 %v1607
    %v1650 = vunpack.c.l.b16 %v1608
    %v1651 = vunpack.c.h.b16 %v1608
    %v1652 = vunpack.c.l.b16 %v1609
    %v1653 = vunpack.c.h.b16 %v1609
    %v1654 = vunpack.c.l.b16 %v1610
    %v1655 = vunpack.c.h.b16 %v1610
    %v1656 = vunpack.c.l.b16 %v1611
    %v1657 = vunpack.c.h.b16 %v1611
    %v1658 = vunpack.c.l.b16 %v1612
    %v1659 = vunpack.c.h.b16 %v1612
    %v1660 = vunpack.c.l.b16 %v1613
    %v1661 = vunpack.c.h.b16 %v1613
    %v1662 = vunpack.c.l.b16 %v1614
    %v1663 = vunpack.c.h.b16 %v1614
    %v1664 = vunpack.c.l.b16 %v1615
    %v1665 = vunpack.c.h.b16 %v1615
    %v1666 = vunpack.c.l.b16 %v1616
    %v1667 = vunpack.c.h.b16 %v1616
    %v1668 = vunpack.c.l.b16 %v1617
    %v1669 = vunpack.c.h.b16 %v1617
    %v1670 = vunpack.c.l.b16 %v1618
    %v1671 = vunpack.c.h.b16 %v1618
    %v1672 = vunpack.c.l.b16 %v1619
    %v1673 = vunpack.c.h.b16 %v1619
    %v1674 = vpack.c.b16 %v1644, %v1642
    %v1675 = vpack.c.b16 %v1645, %v1643
    %v1676 = vpack.c.b16 %v1648, %v1646
    %v1677 = vpack.c.b16 %v1649, %v1647
    %v1678 = vpack.c.b16 %v1652, %v1650
    %v1679 = vpack.c.b16 %v1653, %v1651
    %v1680 = vpack.c.b16 %v1656, %v1654
    %v1681 = vpack.c.b16 %v1657, %v1655
    %v1682 = vpack.c.b16 %v1660, %v1658
    %v1683 = vpack.c.b16 %v1661, %v1659
    %v1684 = vpack.c.b16 %v1664, %v1662
    %v1685 = vpack.c.b16 %v1665, %v1663
    %v1686 = vpack.c.b16 %v1668, %v1666
    %v1687 = vpack.c.b16 %v1669, %v1667
    %v1688 = vpack.c.b16 %v1672, %v1670
    %v1689 = vpack.c.b16 %v1673, %v1671
    %1706 = vmatpush.bf16.msra.mxu0 %v1688
    %1707 = vmatpush.bf16.msra.mxu0 %v1686
    %1708 = vmatpush.bf16.msra.mxu0 %v1684
    %1709 = vmatpush.bf16.msra.mxu0 %v1682
    %1710 = vmatpush.bf16.msra.mxu0 %v1680
    %1711 = vmatpush.bf16.msra.mxu0 %v1678
    %1712 = vmatpush.bf16.msra.mxu0 %v1676
    %1713 = vmatpush.bf16.msra.mxu0 %v1674
    %1714 = vmatmul.bf16.gmra.mxu0 %v1620
    %v1715 = vpop.f32.mrf.mxu0
    %v1716 = vadd.f32 %v1622, %v1715
    %v1717 = vpop.f32.mrf.mxu0
    %1718 = vdwg.mxu0
    %1719 = vmatpush.bf16.msra.mxu0 %v1689
    %1720 = vmatpush.bf16.msra.mxu0 %v1687
    %1721 = vmatpush.bf16.msra.mxu0 %v1685
    %1722 = vmatpush.bf16.msra.mxu0 %v1683
    %1723 = vmatpush.bf16.msra.mxu0 %v1681
    %1724 = vmatpush.bf16.msra.mxu0 %v1679
    %1725 = vmatpush.bf16.msra.mxu0 %v1677
    %1726 = vmatpush.bf16.msra.mxu0 %v1675
    %1727 = vmatmul.bf16.gmra.mxu0 %v1620
    %v1728 = vpop.f32.mrf.mxu0
    %v1729 = vadd.f32 %v1623, %v1728
    %v1730 = vpop.f32.mrf.mxu0
    %1731 = vdwg.mxu0
    %v1732 = vmax.f32 %v1716, 0.0
    %v1733 = vmax.f32 %v1729, 0.0
    %v1734 = vld [vmem:[%s1] sm:$0xff]
    %vm1735 = vcmask 64512
    %v1737 = vsel %vm1735, %v1734, 0
    %1739 = vmatpush.msra.mxu0 0.0
    %1740 = vmatpush.msra.mxu0 0.0
    %1741 = vmatpush.msra.mxu0 0.0
    %1742 = vmatpush.msra.mxu0 0.0
    %1743 = vmatpush.msra.mxu0 0.0
    %1744 = vmatpush.msra.mxu0 0.0
    %1745 = vmatpush.msra.mxu0 0.0
    %1746 = vmatpush.msra.mxu0 0.0
    %1747 = vmatpush.msra.mxu0 0.0
    %1748 = vmatpush.msra.mxu0 0.0
    %1749 = vmatpush.msra.mxu0 0.0
    %1750 = vmatpush.msra.mxu0 0.0
    %1751 = vmatpush.msra.mxu0 0.0
    %1752 = vmatpush.msra.mxu0 0.0
    %1753 = vmatpush.msra.mxu0 0.0
    %1754 = vmatpush.msra.mxu0 %v1733
    %1755 = vmatmul.f32.gmra.mxu0 %v1737
    %v1756 = vpop.f32.mrf.mxu0
    %v1757 = vadd.f32 0.0, %v1756
    %1758 = vdwg.mxu0
    %v1759 = vadd.f32 %v1732, %v1757
    %v1760 = vld [vmem:[%s5] sm:$0xf]
    %v1761 = vld [vmem:[%s5 + $0x4] sm:$0xf]
    %v1762 = vld [vmem:[%s5 + $0x8] sm:$0xf]
    %v1763 = vld [vmem:[%s5 + $0xc] sm:$0xf]
    %v1764 = vld [vmem:[%s5 + $0x10] sm:$0xf]
    %v1765 = vld [vmem:[%s5 + $0x14] sm:$0xf]
    %v1766 = vld [vmem:[%s5 + $0x18] sm:$0xf]
    %v1767 = vld [vmem:[%s5 + $0x1c] sm:$0xf]
    %v1768 = vld [vmem:[%s5 + $0x20] sm:$0xf]
    %v1769 = vld [vmem:[%s5 + $0x24] sm:$0xf]
    %v1770 = vld [vmem:[%s5 + $0x28] sm:$0xf]
    %v1771 = vld [vmem:[%s5 + $0x2c] sm:$0xf]
    %v1772 = vld [vmem:[%s5 + $0x30] sm:$0xf]
    %v1773 = vld [vmem:[%s5 + $0x34] sm:$0xf]
    %v1774 = vld [vmem:[%s5 + $0x38] sm:$0xf]
    %v1775 = vld [vmem:[%s5 + $0x3c] sm:$0xf]
    %v1776 = vpack.c.bf16 %v1759, %v1759
    %v1793 = vunpack.c.l.b16 %v1760
    %v1794 = vunpack.c.l.b16 %v1761
    %v1795 = vunpack.c.l.b16 %v1762
    %v1796 = vunpack.c.l.b16 %v1763
    %v1797 = vunpack.c.l.b16 %v1764
    %v1798 = vunpack.c.l.b16 %v1765
    %v1799 = vunpack.c.l.b16 %v1766
    %v1800 = vunpack.c.l.b16 %v1767
    %v1801 = vunpack.c.l.b16 %v1768
    %v1802 = vunpack.c.l.b16 %v1769
    %v1803 = vunpack.c.l.b16 %v1770
    %v1804 = vunpack.c.l.b16 %v1771
    %v1805 = vunpack.c.l.b16 %v1772
    %v1806 = vunpack.c.l.b16 %v1773
    %v1807 = vunpack.c.l.b16 %v1774
    %v1808 = vunpack.c.l.b16 %v1775
    %v1809 = vpack.c.b16 %v1794, %v1793
    %v1810 = vpack.c.b16 %v1796, %v1795
    %v1811 = vpack.c.b16 %v1798, %v1797
    %v1812 = vpack.c.b16 %v1800, %v1799
    %v1813 = vpack.c.b16 %v1802, %v1801
    %v1814 = vpack.c.b16 %v1804, %v1803
    %v1815 = vpack.c.b16 %v1806, %v1805
    %v1816 = vpack.c.b16 %v1808, %v1807
    %1825 = vmatpush.bf16.msra.mxu0 %v1816
    %1826 = vmatpush.bf16.msra.mxu0 %v1815
    %1827 = vmatpush.bf16.msra.mxu0 %v1814
    %1828 = vmatpush.bf16.msra.mxu0 %v1813
    %1829 = vmatpush.bf16.msra.mxu0 %v1812
    %1830 = vmatpush.bf16.msra.mxu0 %v1811
    %1831 = vmatpush.bf16.msra.mxu0 %v1810
    %1832 = vmatpush.bf16.msra.mxu0 %v1809
    %1833 = vmatmul.bf16.gmra.mxu0 %v1776
    %v1834 = vpop.f32.mrf.mxu0
    %v1835 = vadd.f32 %v89, %v1834
    %v1836 = vpop.f32.mrf.mxu0
    %1837 = vdwg.mxu0
    %v1838 = vmax.f32 %v1835, 0.0
    %v1839 = vld [vmem:[%s6] sm:$0xff]
    %v1840 = vld [vmem:[%s6 + $0x8] sm:$0xff]
    %v1841 = vld [vmem:[%s6 + $0x10] sm:$0xff]
    %v1842 = vld [vmem:[%s6 + $0x18] sm:$0xff]
    %v1843 = vld [vmem:[%s6 + $0x20] sm:$0xff]
    %v1844 = vld [vmem:[%s6 + $0x28] sm:$0xff]
    %v1845 = vld [vmem:[%s6 + $0x30] sm:$0xff]
    %v1846 = vld [vmem:[%s6 + $0x38] sm:$0xff]
    %v1847 = vld [vmem:[%s6 + $0x40] sm:$0xff]
    %v1848 = vld [vmem:[%s6 + $0x48] sm:$0xff]
    %v1849 = vld [vmem:[%s6 + $0x50] sm:$0xff]
    %v1850 = vld [vmem:[%s6 + $0x58] sm:$0xff]
    %v1851 = vld [vmem:[%s6 + $0x60] sm:$0xff]
    %v1852 = vld [vmem:[%s6 + $0x68] sm:$0xff]
    %v1853 = vld [vmem:[%s6 + $0x70] sm:$0xff]
    %v1854 = vld [vmem:[%s6 + $0x78] sm:$0xff]
    %v1855 = vpack.c.bf16 %v1838, %v1838
    %v1857 = vperm.slane %v91, 0
    %v1858 = vperm.slane %v91, 1
    %v1877 = vunpack.c.l.b16 %v1839
    %v1878 = vunpack.c.h.b16 %v1839
    %v1879 = vunpack.c.l.b16 %v1840
    %v1880 = vunpack.c.h.b16 %v1840
    %v1881 = vunpack.c.l.b16 %v1841
    %v1882 = vunpack.c.h.b16 %v1841
    %v1883 = vunpack.c.l.b16 %v1842
    %v1884 = vunpack.c.h.b16 %v1842
    %v1885 = vunpack.c.l.b16 %v1843
    %v1886 = vunpack.c.h.b16 %v1843
    %v1887 = vunpack.c.l.b16 %v1844
    %v1888 = vunpack.c.h.b16 %v1844
    %v1889 = vunpack.c.l.b16 %v1845
    %v1890 = vunpack.c.h.b16 %v1845
    %v1891 = vunpack.c.l.b16 %v1846
    %v1892 = vunpack.c.h.b16 %v1846
    %v1893 = vunpack.c.l.b16 %v1847
    %v1894 = vunpack.c.h.b16 %v1847
    %v1895 = vunpack.c.l.b16 %v1848
    %v1896 = vunpack.c.h.b16 %v1848
    %v1897 = vunpack.c.l.b16 %v1849
    %v1898 = vunpack.c.h.b16 %v1849
    %v1899 = vunpack.c.l.b16 %v1850
    %v1900 = vunpack.c.h.b16 %v1850
    %v1901 = vunpack.c.l.b16 %v1851
    %v1902 = vunpack.c.h.b16 %v1851
    %v1903 = vunpack.c.l.b16 %v1852
    %v1904 = vunpack.c.h.b16 %v1852
    %v1905 = vunpack.c.l.b16 %v1853
    %v1906 = vunpack.c.h.b16 %v1853
    %v1907 = vunpack.c.l.b16 %v1854
    %v1908 = vunpack.c.h.b16 %v1854
    %v1909 = vpack.c.b16 %v1879, %v1877
    %v1910 = vpack.c.b16 %v1880, %v1878
    %v1911 = vpack.c.b16 %v1883, %v1881
    %v1912 = vpack.c.b16 %v1884, %v1882
    %v1913 = vpack.c.b16 %v1887, %v1885
    %v1914 = vpack.c.b16 %v1888, %v1886
    %v1915 = vpack.c.b16 %v1891, %v1889
    %v1916 = vpack.c.b16 %v1892, %v1890
    %v1917 = vpack.c.b16 %v1895, %v1893
    %v1918 = vpack.c.b16 %v1896, %v1894
    %v1919 = vpack.c.b16 %v1899, %v1897
    %v1920 = vpack.c.b16 %v1900, %v1898
    %v1921 = vpack.c.b16 %v1903, %v1901
    %v1922 = vpack.c.b16 %v1904, %v1902
    %v1923 = vpack.c.b16 %v1907, %v1905
    %v1924 = vpack.c.b16 %v1908, %v1906
    %1941 = vmatpush.bf16.msra.mxu0 %v1923
    %1942 = vmatpush.bf16.msra.mxu0 %v1921
    %1943 = vmatpush.bf16.msra.mxu0 %v1919
    %1944 = vmatpush.bf16.msra.mxu0 %v1917
    %1945 = vmatpush.bf16.msra.mxu0 %v1915
    %1946 = vmatpush.bf16.msra.mxu0 %v1913
    %1947 = vmatpush.bf16.msra.mxu0 %v1911
    %1948 = vmatpush.bf16.msra.mxu0 %v1909
    %1949 = vmatmul.bf16.gmra.mxu0 %v1855
    %v1950 = vpop.f32.mrf.mxu0
    %v1951 = vadd.f32 %v1857, %v1950
    %v1952 = vpop.f32.mrf.mxu0
    %1953 = vdwg.mxu0
    %1954 = vmatpush.bf16.msra.mxu0 %v1924
    %1955 = vmatpush.bf16.msra.mxu0 %v1922
    %1956 = vmatpush.bf16.msra.mxu0 %v1920
    %1957 = vmatpush.bf16.msra.mxu0 %v1918
    %1958 = vmatpush.bf16.msra.mxu0 %v1916
    %1959 = vmatpush.bf16.msra.mxu0 %v1914
    %1960 = vmatpush.bf16.msra.mxu0 %v1912
    %1961 = vmatpush.bf16.msra.mxu0 %v1910
    %1962 = vmatmul.bf16.gmra.mxu0 %v1855
    %v1963 = vpop.f32.mrf.mxu0
    %v1964 = vadd.f32 %v1858, %v1963
    %v1965 = vpop.f32.mrf.mxu0
    %1966 = vdwg.mxu0
    %v1967 = vmax.f32 %v1951, 0.0
    %v1968 = vmax.f32 %v1964, 0.0
    %v1969 = vld [vmem:[#allocation7] sm:$0xff]
    %v1970 = vld [vmem:[#allocation7 + $0x8] sm:$0xff]
    %v1971 = vld [vmem:[#allocation7 + $0x10] sm:$0xff]
    %v1972 = vld [vmem:[#allocation7 + $0x18] sm:$0xff]
    %v1973 = vld [vmem:[#allocation7 + $0x20] sm:$0xff]
    %v1974 = vld [vmem:[#allocation7 + $0x28] sm:$0xff]
    %v1975 = vld [vmem:[#allocation7 + $0x30] sm:$0xff]
    %v1976 = vld [vmem:[#allocation7 + $0x38] sm:$0xff]
    %v1977 = vld [vmem:[#allocation7 + $0x40] sm:$0xff]
    %v1978 = vld [vmem:[#allocation7 + $0x48] sm:$0xff]
    %v1979 = vld [vmem:[#allocation7 + $0x50] sm:$0xff]
    %v1980 = vld [vmem:[#allocation7 + $0x58] sm:$0xff]
    %v1981 = vld [vmem:[#allocation7 + $0x60] sm:$0xff]
    %v1982 = vld [vmem:[#allocation7 + $0x68] sm:$0xff]
    %v1983 = vld [vmem:[#allocation7 + $0x70] sm:$0xff]
    %v1984 = vld [vmem:[#allocation7 + $0x78] sm:$0xff]
    %v1985 = vld [vmem:[#allocation7 + $0x80] sm:$0xff]
    %v1986 = vld [vmem:[#allocation7 + $0x88] sm:$0xff]
    %v1987 = vld [vmem:[#allocation7 + $0x90] sm:$0xff]
    %v1988 = vld [vmem:[#allocation7 + $0x98] sm:$0xff]
    %v1989 = vld [vmem:[#allocation7 + $0xa0] sm:$0xff]
    %v1990 = vld [vmem:[#allocation7 + $0xa8] sm:$0xff]
    %v1991 = vld [vmem:[#allocation7 + $0xb0] sm:$0xff]
    %v1992 = vld [vmem:[#allocation7 + $0xb8] sm:$0xff]
    %v1993 = vld [vmem:[#allocation7 + $0xc0] sm:$0xff]
    %v1994 = vld [vmem:[#allocation7 + $0xc8] sm:$0xff]
    %v1995 = vld [vmem:[#allocation7 + $0xd0] sm:$0xff]
    %v1996 = vld [vmem:[#allocation7 + $0xd8] sm:$0xff]
    %v1997 = vld [vmem:[#allocation7 + $0xe0] sm:$0xff]
    %v1998 = vld [vmem:[#allocation7 + $0xe8] sm:$0xff]
    %v1999 = vld [vmem:[#allocation7 + $0xf0] sm:$0xff]
    %v2000 = vld [vmem:[#allocation7 + $0xf8] sm:$0xff]
    %v2001 = vpack.c.bf16 %v1967, %v1967
    %v2002 = vpack.c.bf16 %v1968, %v1968
    %v2004 = vperm.slane %v93, 0
    %v2005 = vperm.slane %v93, 1
    %v2040 = vunpack.c.l.b16 %v1969
    %v2041 = vunpack.c.h.b16 %v1969
    %v2042 = vunpack.c.l.b16 %v1970
    %v2043 = vunpack.c.h.b16 %v1970
    %v2044 = vunpack.c.l.b16 %v1971
    %v2045 = vunpack.c.h.b16 %v1971
    %v2046 = vunpack.c.l.b16 %v1972
    %v2047 = vunpack.c.h.b16 %v1972
    %v2048 = vunpack.c.l.b16 %v1973
    %v2049 = vunpack.c.h.b16 %v1973
    %v2050 = vunpack.c.l.b16 %v1974
    %v2051 = vunpack.c.h.b16 %v1974
    %v2052 = vunpack.c.l.b16 %v1975
    %v2053 = vunpack.c.h.b16 %v1975
    %v2054 = vunpack.c.l.b16 %v1976
    %v2055 = vunpack.c.h.b16 %v1976
    %v2056 = vunpack.c.l.b16 %v1977
    %v2057 = vunpack.c.h.b16 %v1977
    %v2058 = vunpack.c.l.b16 %v1978
    %v2059 = vunpack.c.h.b16 %v1978
    %v2060 = vunpack.c.l.b16 %v1979
    %v2061 = vunpack.c.h.b16 %v1979
    %v2062 = vunpack.c.l.b16 %v1980
    %v2063 = vunpack.c.h.b16 %v1980
    %v2064 = vunpack.c.l.b16 %v1981
    %v2065 = vunpack.c.h.b16 %v1981
    %v2066 = vunpack.c.l.b16 %v1982
    %v2067 = vunpack.c.h.b16 %v1982
    %v2068 = vunpack.c.l.b16 %v1983
    %v2069 = vunpack.c.h.b16 %v1983
    %v2070 = vunpack.c.l.b16 %v1984
    %v2071 = vunpack.c.h.b16 %v1984
    %v2072 = vunpack.c.l.b16 %v1985
    %v2073 = vunpack.c.h.b16 %v1985
    %v2074 = vunpack.c.l.b16 %v1986
    %v2075 = vunpack.c.h.b16 %v1986
    %v2076 = vunpack.c.l.b16 %v1987
    %v2077 = vunpack.c.h.b16 %v1987
    %v2078 = vunpack.c.l.b16 %v1988
    %v2079 = vunpack.c.h.b16 %v1988
    %v2080 = vunpack.c.l.b16 %v1989
    %v2081 = vunpack.c.h.b16 %v1989
    %v2082 = vunpack.c.l.b16 %v1990
    %v2083 = vunpack.c.h.b16 %v1990
    %v2084 = vunpack.c.l.b16 %v1991
    %v2085 = vunpack.c.h.b16 %v1991
    %v2086 = vunpack.c.l.b16 %v1992
    %v2087 = vunpack.c.h.b16 %v1992
    %v2088 = vunpack.c.l.b16 %v1993
    %v2089 = vunpack.c.h.b16 %v1993
    %v2090 = vunpack.c.l.b16 %v1994
    %v2091 = vunpack.c.h.b16 %v1994
    %v2092 = vunpack.c.l.b16 %v1995
    %v2093 = vunpack.c.h.b16 %v1995
    %v2094 = vunpack.c.l.b16 %v1996
    %v2095 = vunpack.c.h.b16 %v1996
    %v2096 = vunpack.c.l.b16 %v1997
    %v2097 = vunpack.c.h.b16 %v1997
    %v2098 = vunpack.c.l.b16 %v1998
    %v2099 = vunpack.c.h.b16 %v1998
    %v2100 = vunpack.c.l.b16 %v1999
    %v2101 = vunpack.c.h.b16 %v1999
    %v2102 = vunpack.c.l.b16 %v2000
    %v2103 = vunpack.c.h.b16 %v2000
    %v2104 = vpack.c.b16 %v2042, %v2040
    %v2105 = vpack.c.b16 %v2043, %v2041
    %v2106 = vpack.c.b16 %v2046, %v2044
    %v2107 = vpack.c.b16 %v2047, %v2045
    %v2108 = vpack.c.b16 %v2050, %v2048
    %v2109 = vpack.c.b16 %v2051, %v2049
    %v2110 = vpack.c.b16 %v2054, %v2052
    %v2111 = vpack.c.b16 %v2055, %v2053
    %v2112 = vpack.c.b16 %v2058, %v2056
    %v2113 = vpack.c.b16 %v2059, %v2057
    %v2114 = vpack.c.b16 %v2062, %v2060
    %v2115 = vpack.c.b16 %v2063, %v2061
    %v2116 = vpack.c.b16 %v2066, %v2064
    %v2117 = vpack.c.b16 %v2067, %v2065
    %v2118 = vpack.c.b16 %v2070, %v2068
    %v2119 = vpack.c.b16 %v2071, %v2069
    %v2120 = vpack.c.b16 %v2074, %v2072
    %v2121 = vpack.c.b16 %v2075, %v2073
    %v2122 = vpack.c.b16 %v2078, %v2076
    %v2123 = vpack.c.b16 %v2079, %v2077
    %v2124 = vpack.c.b16 %v2082, %v2080
    %v2125 = vpack.c.b16 %v2083, %v2081
    %v2126 = vpack.c.b16 %v2086, %v2084
    %v2127 = vpack.c.b16 %v2087, %v2085
    %v2128 = vpack.c.b16 %v2090, %v2088
    %v2129 = vpack.c.b16 %v2091, %v2089
    %v2130 = vpack.c.b16 %v2094, %v2092
    %v2131 = vpack.c.b16 %v2095, %v2093
    %v2132 = vpack.c.b16 %v2098, %v2096
    %v2133 = vpack.c.b16 %v2099, %v2097
    %v2134 = vpack.c.b16 %v2102, %v2100
    %v2135 = vpack.c.b16 %v2103, %v2101
    %2168 = vmatpush.bf16.msra.mxu0 %v2118
    %2169 = vmatpush.bf16.msra.mxu0 %v2116
    %2170 = vmatpush.bf16.msra.mxu0 %v2114
    %2171 = vmatpush.bf16.msra.mxu0 %v2112
    %2172 = vmatpush.bf16.msra.mxu0 %v2110
    %2173 = vmatpush.bf16.msra.mxu0 %v2108
    %2174 = vmatpush.bf16.msra.mxu0 %v2106
    %2175 = vmatpush.bf16.msra.mxu0 %v2104
    %2176 = vmatmul.bf16.gmra.mxu0 %v2001
    %v2177 = vpop.f32.mrf.mxu0
    %v2178 = vadd.f32 %v2004, %v2177
    %v2179 = vpop.f32.mrf.mxu0
    %2180 = vdwg.mxu0
    %2181 = vmatpush.bf16.msra.mxu0 %v2134
    %2182 = vmatpush.bf16.msra.mxu0 %v2132
    %2183 = vmatpush.bf16.msra.mxu0 %v2130
    %2184 = vmatpush.bf16.msra.mxu0 %v2128
    %2185 = vmatpush.bf16.msra.mxu0 %v2126
    %2186 = vmatpush.bf16.msra.mxu0 %v2124
    %2187 = vmatpush.bf16.msra.mxu0 %v2122
    %2188 = vmatpush.bf16.msra.mxu0 %v2120
    %2189 = vmatmul.bf16.gmra.mxu0 %v2002
    %v2190 = vpop.f32.mrf.mxu0
    %v2191 = vadd.f32 %v2178, %v2190
    %v2192 = vpop.f32.mrf.mxu0
    %2193 = vdwg.mxu0
    %2194 = vmatpush.bf16.msra.mxu0 %v2119
    %2195 = vmatpush.bf16.msra.mxu0 %v2117
    %2196 = vmatpush.bf16.msra.mxu0 %v2115
    %2197 = vmatpush.bf16.msra.mxu0 %v2113
    %2198 = vmatpush.bf16.msra.mxu0 %v2111
    %2199 = vmatpush.bf16.msra.mxu0 %v2109
    %2200 = vmatpush.bf16.msra.mxu0 %v2107
    %2201 = vmatpush.bf16.msra.mxu0 %v2105
    %2202 = vmatmul.bf16.gmra.mxu0 %v2001
    %v2203 = vpop.f32.mrf.mxu0
    %v2204 = vadd.f32 %v2005, %v2203
    %v2205 = vpop.f32.mrf.mxu0
    %2206 = vdwg.mxu0
    %2207 = vmatpush.bf16.msra.mxu0 %v2135
    %2208 = vmatpush.bf16.msra.mxu0 %v2133
    %2209 = vmatpush.bf16.msra.mxu0 %v2131
    %2210 = vmatpush.bf16.msra.mxu0 %v2129
    %2211 = vmatpush.bf16.msra.mxu0 %v2127
    %2212 = vmatpush.bf16.msra.mxu0 %v2125
    %2213 = vmatpush.bf16.msra.mxu0 %v2123
    %2214 = vmatpush.bf16.msra.mxu0 %v2121
    %2215 = vmatmul.bf16.gmra.mxu0 %v2002
    %v2216 = vpop.f32.mrf.mxu0
    %v2217 = vadd.f32 %v2204, %v2216
    %v2218 = vpop.f32.mrf.mxu0
    %2219 = vdwg.mxu0
    %v2220 = vmax.f32 %v2191, 0.0
    %v2221 = vmax.f32 %v2217, 0.0
    %s2222 = scalar_lea.vmem [#allocation7], 256
    %v2223 = vld [vmem:[%s2222] sm:$0xff]
    %v2224 = vld [vmem:[%s2222 + $0x8] sm:$0xff]
    %v2225 = vld [vmem:[%s2222 + $0x10] sm:$0xff]
    %v2226 = vld [vmem:[%s2222 + $0x18] sm:$0xff]
    %v2227 = vld [vmem:[%s2222 + $0x20] sm:$0xff]
    %v2228 = vld [vmem:[%s2222 + $0x28] sm:$0xff]
    %v2229 = vld [vmem:[%s2222 + $0x30] sm:$0xff]
    %v2230 = vld [vmem:[%s2222 + $0x38] sm:$0xff]
    %v2231 = vld [vmem:[%s2222 + $0x40] sm:$0xff]
    %v2232 = vld [vmem:[%s2222 + $0x48] sm:$0xff]
    %v2233 = vld [vmem:[%s2222 + $0x50] sm:$0xff]
    %v2234 = vld [vmem:[%s2222 + $0x58] sm:$0xff]
    %v2235 = vld [vmem:[%s2222 + $0x60] sm:$0xff]
    %v2236 = vld [vmem:[%s2222 + $0x68] sm:$0xff]
    %v2237 = vld [vmem:[%s2222 + $0x70] sm:$0xff]
    %v2238 = vld [vmem:[%s2222 + $0x78] sm:$0xff]
    %v2239 = vld [vmem:[%s2222 + $0x80] sm:$0xff]
    %v2240 = vld [vmem:[%s2222 + $0x88] sm:$0xff]
    %v2241 = vld [vmem:[%s2222 + $0x90] sm:$0xff]
    %v2242 = vld [vmem:[%s2222 + $0x98] sm:$0xff]
    %v2243 = vld [vmem:[%s2222 + $0xa0] sm:$0xff]
    %v2244 = vld [vmem:[%s2222 + $0xa8] sm:$0xff]
    %v2245 = vld [vmem:[%s2222 + $0xb0] sm:$0xff]
    %v2246 = vld [vmem:[%s2222 + $0xb8] sm:$0xff]
    %v2247 = vld [vmem:[%s2222 + $0xc0] sm:$0xff]
    %v2248 = vld [vmem:[%s2222 + $0xc8] sm:$0xff]
    %v2249 = vld [vmem:[%s2222 + $0xd0] sm:$0xff]
    %v2250 = vld [vmem:[%s2222 + $0xd8] sm:$0xff]
    %v2251 = vld [vmem:[%s2222 + $0xe0] sm:$0xff]
    %v2252 = vld [vmem:[%s2222 + $0xe8] sm:$0xff]
    %v2253 = vld [vmem:[%s2222 + $0xf0] sm:$0xff]
    %v2254 = vld [vmem:[%s2222 + $0xf8] sm:$0xff]
    %v2255 = vpack.c.bf16 %v2220, %v2220
    %v2256 = vpack.c.bf16 %v2221, %v2221
    %v2258 = vperm.slane %v95, 0
    %v2259 = vperm.slane %v95, 1
    %v2294 = vunpack.c.l.b16 %v2223
    %v2295 = vunpack.c.h.b16 %v2223
    %v2296 = vunpack.c.l.b16 %v2224
    %v2297 = vunpack.c.h.b16 %v2224
    %v2298 = vunpack.c.l.b16 %v2225
    %v2299 = vunpack.c.h.b16 %v2225
    %v2300 = vunpack.c.l.b16 %v2226
    %v2301 = vunpack.c.h.b16 %v2226
    %v2302 = vunpack.c.l.b16 %v2227
    %v2303 = vunpack.c.h.b16 %v2227
    %v2304 = vunpack.c.l.b16 %v2228
    %v2305 = vunpack.c.h.b16 %v2228
    %v2306 = vunpack.c.l.b16 %v2229
    %v2307 = vunpack.c.h.b16 %v2229
    %v2308 = vunpack.c.l.b16 %v2230
    %v2309 = vunpack.c.h.b16 %v2230
    %v2310 = vunpack.c.l.b16 %v2231
    %v2311 = vunpack.c.h.b16 %v2231
    %v2312 = vunpack.c.l.b16 %v2232
    %v2313 = vunpack.c.h.b16 %v2232
    %v2314 = vunpack.c.l.b16 %v2233
    %v2315 = vunpack.c.h.b16 %v2233
    %v2316 = vunpack.c.l.b16 %v2234
    %v2317 = vunpack.c.h.b16 %v2234
    %v2318 = vunpack.c.l.b16 %v2235
    %v2319 = vunpack.c.h.b16 %v2235
    %v2320 = vunpack.c.l.b16 %v2236
    %v2321 = vunpack.c.h.b16 %v2236
    %v2322 = vunpack.c.l.b16 %v2237
    %v2323 = vunpack.c.h.b16 %v2237
    %v2324 = vunpack.c.l.b16 %v2238
    %v2325 = vunpack.c.h.b16 %v2238
    %v2326 = vunpack.c.l.b16 %v2239
    %v2327 = vunpack.c.h.b16 %v2239
    %v2328 = vunpack.c.l.b16 %v2240
    %v2329 = vunpack.c.h.b16 %v2240
    %v2330 = vunpack.c.l.b16 %v2241
    %v2331 = vunpack.c.h.b16 %v2241
    %v2332 = vunpack.c.l.b16 %v2242
    %v2333 = vunpack.c.h.b16 %v2242
    %v2334 = vunpack.c.l.b16 %v2243
    %v2335 = vunpack.c.h.b16 %v2243
    %v2336 = vunpack.c.l.b16 %v2244
    %v2337 = vunpack.c.h.b16 %v2244
    %v2338 = vunpack.c.l.b16 %v2245
    %v2339 = vunpack.c.h.b16 %v2245
    %v2340 = vunpack.c.l.b16 %v2246
    %v2341 = vunpack.c.h.b16 %v2246
    %v2342 = vunpack.c.l.b16 %v2247
    %v2343 = vunpack.c.h.b16 %v2247
    %v2344 = vunpack.c.l.b16 %v2248
    %v2345 = vunpack.c.h.b16 %v2248
    %v2346 = vunpack.c.l.b16 %v2249
    %v2347 = vunpack.c.h.b16 %v2249
    %v2348 = vunpack.c.l.b16 %v2250
    %v2349 = vunpack.c.h.b16 %v2250
    %v2350 = vunpack.c.l.b16 %v2251
    %v2351 = vunpack.c.h.b16 %v2251
    %v2352 = vunpack.c.l.b16 %v2252
    %v2353 = vunpack.c.h.b16 %v2252
    %v2354 = vunpack.c.l.b16 %v2253
    %v2355 = vunpack.c.h.b16 %v2253
    %v2356 = vunpack.c.l.b16 %v2254
    %v2357 = vunpack.c.h.b16 %v2254
    %v2358 = vpack.c.b16 %v2296, %v2294
    %v2359 = vpack.c.b16 %v2297, %v2295
    %v2360 = vpack.c.b16 %v2300, %v2298
    %v2361 = vpack.c.b16 %v2301, %v2299
    %v2362 = vpack.c.b16 %v2304, %v2302
    %v2363 = vpack.c.b16 %v2305, %v2303
    %v2364 = vpack.c.b16 %v2308, %v2306
    %v2365 = vpack.c.b16 %v2309, %v2307
    %v2366 = vpack.c.b16 %v2312, %v2310
    %v2367 = vpack.c.b16 %v2313, %v2311
    %v2368 = vpack.c.b16 %v2316, %v2314
    %v2369 = vpack.c.b16 %v2317, %v2315
    %v2370 = vpack.c.b16 %v2320, %v2318
    %v2371 = vpack.c.b16 %v2321, %v2319
    %v2372 = vpack.c.b16 %v2324, %v2322
    %v2373 = vpack.c.b16 %v2325, %v2323
    %v2374 = vpack.c.b16 %v2328, %v2326
    %v2375 = vpack.c.b16 %v2329, %v2327
    %v2376 = vpack.c.b16 %v2332, %v2330
    %v2377 = vpack.c.b16 %v2333, %v2331
    %v2378 = vpack.c.b16 %v2336, %v2334
    %v2379 = vpack.c.b16 %v2337, %v2335
    %v2380 = vpack.c.b16 %v2340, %v2338
    %v2381 = vpack.c.b16 %v2341, %v2339
    %v2382 = vpack.c.b16 %v2344, %v2342
    %v2383 = vpack.c.b16 %v2345, %v2343
    %v2384 = vpack.c.b16 %v2348, %v2346
    %v2385 = vpack.c.b16 %v2349, %v2347
    %v2386 = vpack.c.b16 %v2352, %v2350
    %v2387 = vpack.c.b16 %v2353, %v2351
    %v2388 = vpack.c.b16 %v2356, %v2354
    %v2389 = vpack.c.b16 %v2357, %v2355
    %2422 = vmatpush.bf16.msra.mxu0 %v2372
    %2423 = vmatpush.bf16.msra.mxu0 %v2370
    %2424 = vmatpush.bf16.msra.mxu0 %v2368
    %2425 = vmatpush.bf16.msra.mxu0 %v2366
    %2426 = vmatpush.bf16.msra.mxu0 %v2364
    %2427 = vmatpush.bf16.msra.mxu0 %v2362
    %2428 = vmatpush.bf16.msra.mxu0 %v2360
    %2429 = vmatpush.bf16.msra.mxu0 %v2358
    %2430 = vmatmul.bf16.gmra.mxu0 %v2255
    %v2431 = vpop.f32.mrf.mxu0
    %v2432 = vadd.f32 %v2258, %v2431
    %v2433 = vpop.f32.mrf.mxu0
    %2434 = vdwg.mxu0
    %2435 = vmatpush.bf16.msra.mxu0 %v2388
    %2436 = vmatpush.bf16.msra.mxu0 %v2386
    %2437 = vmatpush.bf16.msra.mxu0 %v2384
    %2438 = vmatpush.bf16.msra.mxu0 %v2382
    %2439 = vmatpush.bf16.msra.mxu0 %v2380
    %2440 = vmatpush.bf16.msra.mxu0 %v2378
    %2441 = vmatpush.bf16.msra.mxu0 %v2376
    %2442 = vmatpush.bf16.msra.mxu0 %v2374
    %2443 = vmatmul.bf16.gmra.mxu0 %v2256
    %v2444 = vpop.f32.mrf.mxu0
    %v2445 = vadd.f32 %v2432, %v2444
    %v2446 = vpop.f32.mrf.mxu0
    %2447 = vdwg.mxu0
    %2448 = vmatpush.bf16.msra.mxu0 %v2373
    %2449 = vmatpush.bf16.msra.mxu0 %v2371
    %2450 = vmatpush.bf16.msra.mxu0 %v2369
    %2451 = vmatpush.bf16.msra.mxu0 %v2367
    %2452 = vmatpush.bf16.msra.mxu0 %v2365
    %2453 = vmatpush.bf16.msra.mxu0 %v2363
    %2454 = vmatpush.bf16.msra.mxu0 %v2361
    %2455 = vmatpush.bf16.msra.mxu0 %v2359
    %2456 = vmatmul.bf16.gmra.mxu0 %v2255
    %v2457 = vpop.f32.mrf.mxu0
    %v2458 = vadd.f32 %v2259, %v2457
    %v2459 = vpop.f32.mrf.mxu0
    %2460 = vdwg.mxu0
    %2461 = vmatpush.bf16.msra.mxu0 %v2389
    %2462 = vmatpush.bf16.msra.mxu0 %v2387
    %2463 = vmatpush.bf16.msra.mxu0 %v2385
    %2464 = vmatpush.bf16.msra.mxu0 %v2383
    %2465 = vmatpush.bf16.msra.mxu0 %v2381
    %2466 = vmatpush.bf16.msra.mxu0 %v2379
    %2467 = vmatpush.bf16.msra.mxu0 %v2377
    %2468 = vmatpush.bf16.msra.mxu0 %v2375
    %2469 = vmatmul.bf16.gmra.mxu0 %v2256
    %v2470 = vpop.f32.mrf.mxu0
    %v2471 = vadd.f32 %v2458, %v2470
    %v2472 = vpop.f32.mrf.mxu0
    %2473 = vdwg.mxu0
    %v2474 = vmul.f32 %v2445, 0.5
    %v2475 = vmul.f32 %v2471, 0.5
    %v2476 = vtanh.pop %v2474
    %v2477 = vtanh.pop %v2475
    %v2478 = vadd.f32 %v2476, 1.0
    %v2479 = vadd.f32 %v2477, 1.0
    %v2480 = vmul.f32 %v2478, 0.5
    %v2481 = vmul.f32 %v2479, 0.5
    %2482 = vst [vmem:[#allocation8] sm:$0xff] %v2480
    %2483 = vst [vmem:[#allocation8 + $0x8] sm:$0xff] %v2481
    %2484 = vst [vmem:[%s10] sm:$0xff] %v1732
    %2485 = vst [vmem:[%s10 + $0x8] sm:$0xff] %v1733
    // Predicated region
    $region50: #{vae_forward.1} parent=1 // pred_check
      _
    $region51: #{vae_forward.1} parent=1 // pred_check_branch
      %2487 = sbr.rel (0) target = $region53
    $region52: #{vae_forward.1} parent=1 // pred_region
      %2489 = vsyncadd [#allocation4], 0
      %s2491 = sshll.u32 [#allocation8], 4
      %s2492 = int_to_ptr.vmem [resolvable:$true] %s2491
      %s2493 = sshll.u32 %s9, 4
      %s2494 = int_to_ptr.hbm [resolvable:$true] %s2493
      %2496 = dma.vmem_to_hbm [thread:$0]  %s2492, 256, %s2494, [#allocation4]
    $region53: #{vae_forward.1} parent=1 // pred_fallthru
      _
    // Predicated region
    $region54: #{vae_forward.1} parent=1 // pred_check
      _
    $region55: #{vae_forward.1} parent=1 // pred_check_branch
      %2498 = sbr.rel (0) target = $region57
    $region56: #{vae_forward.1} parent=1 // pred_region
      _
    $region57: #{vae_forward.1} parent=1 // pred_fallthru
      _
    // Predicated region
    $region58: #{vae_forward.1} parent=1 // pred_check
      _
    $region59: #{vae_forward.1} parent=1 // pred_check_branch
      %2500 = sbr.rel (0) target = $region61
    $region60: #{vae_forward.1} parent=1 // pred_region
      %2502 = dma.done [#allocation4], 256
    $region61: #{vae_forward.1} parent=1 // pred_fallthru
      _
    // Predicated region
    $region62: #{vae_forward.1} parent=1 // pred_check
      _
    $region63: #{vae_forward.1} parent=1 // pred_check_branch
      %2504 = sbr.rel (0) target = $region65
    $region64: #{vae_forward.1} parent=1 // pred_region
      _
    $region65: #{vae_forward.1} parent=1 // pred_fallthru
      _
    %2505 = vsyncpa [#allocation3], 1
    %2506 = vsyncpa [#allocation6], 1
    %2507 = vsyncpa [#allocation4], 1

</llo_original>
